<compile_context>
chip_gen: v5e
topology: v5e:2x2
jax: 0.10.0
libtpu: 0.0.40
codegen_flags: <defaults>
</compile_context>

<pallas_src>
import functools

import jax
import jax.numpy as jnp
from jax.experimental import pallas as pl
from jax.experimental.pallas import tpu as pltpu

EPS = 1e-5


# ------------------------------ small helpers --------------------------------

def _round_up(v, m):
    return (v + m - 1) // m * m


def _pad_last(a, size):
    pad = size - a.shape[-1]
    if pad == 0:
        return a
    return jnp.pad(a, [(0, 0)] * (a.ndim - 1) + [(0, pad)])


def _pick_tile(M, target=1024):
    """Largest divisor of M that is a multiple of 16, <= target, >= 2 steps."""
    hi = min(target, M // 2 if M >= 32 else M)
    for cand in range(hi, 15, -1):
        if M % cand == 0 and cand % 16 == 0:
            return cand
    return M  # fallback: single block


def _vmem_limit_bytes():
    try:
        cap = int(pltpu.get_tpu_info().vmem_capacity_bytes)
    except Exception:
        cap = 64 * 1024 * 1024          # conservative (v7x-sized) fallback
    return min(96 * 1024 * 1024, (cap * 3) // 4)


def _linear_gelu(t):
    """Piecewise-linear GELU of the reference `linearGELU`.

    Predicates are taken directly on t (equivalent to the reference's range
    tests on a2/a5) and reused; the double contribution at t == -1 (a2 branch
    plus 0.15869140625*t) is preserved exactly.
    """
    lt1 = t < 1.0
    v2 = jnp.where((t > -3.0) & (t <= -1.0),
                   -0.0772857666015625 * (t + 3.0) - 0.003997802734375, 0.0)
    s34 = jnp.where(t < 0.0, 0.15869140625, 0.8412780761875)
    v34 = jnp.where((t >= -1.0) & lt1, s34 * t, 0.0)
    v56 = jnp.where(lt1, 0.0,
                    jnp.where(t < 3.0,
                              1.0772857666015625 * (t - 1.0) + 0.8412780761875,
                              t))
    return v2 + v34 + v56


def _bn_scale_shift(stats, count, gamma, beta):
    """Fold batch mean / biased var (from per-tile sum & sumsq) into scale/shift."""
    s = jnp.sum(stats[:, 0, :], axis=0)
    ss = jnp.sum(stats[:, 1, :], axis=0)
    mean = s / count
    var = jnp.maximum(ss / count - mean * mean, 0.0)
    scale = gamma.reshape(-1) * jax.lax.rsqrt(var + EPS)
    shift = beta.reshape(-1) - mean * scale
    return scale.reshape(1, -1), shift.reshape(1, -1)


def _masked_taps(wd, W):
    """(3,3,C) depthwise taps -> (9*W, C) tap planes with the W border zeroed.

    The per-column mask also zeroes the single element that wraps around when
    the +/-1 column shift is realised with a circular pltpu.roll in-kernel.
    """
    j = jnp.arange(W)
    planes = []
    for dy in range(3):
        for dx in range(3):
            ox = dx - 1
            valid = ((j + ox >= 0) & (j + ox < W)).astype(wd.dtype)[:, None]  # (W,1)
            planes.append(valid * wd[dy, dx][None, :])                        # (W,C)
    return jnp.concatenate(planes, axis=0)                                    # (9W,C)


# ------------------------------- kernel bodies --------------------------------

def _conv1_kernel(x_ref, w_ref, b_ref, h_ref, st_ref):
    # 1x1 conv (MXU, bf16 operands / f32 accumulate) + bias + linearGELU.
    h = jnp.dot(x_ref[...], w_ref[...],
                preferred_element_type=jnp.float32) + b_ref[...]
    h = _linear_gelu(h)
    h_ref[...] = h.astype(h_ref.dtype)
    s = jnp.sum(h, axis=0, keepdims=True)
    ss = jnp.sum(h * h, axis=0, keepdims=True)
    st_ref[...] = jnp.concatenate([s, ss], axis=0).reshape(1, 2, -1)   # one store


def _dw_kernel(h1_ref, s1_ref, t1_ref, wtap_ref, bd_ref, h2_ref, st_ref, scr_ref,
               *, H, W, C):
    HW = H * W
    h = h1_ref[...].astype(jnp.float32) * s1_ref[...] + t1_ref[...]    # BN1 apply

    # Vertical-halo scratch (aligned: W % 8 == 0): one zeroed row-block above,
    # one below, one aligned interior store.  Only +/-W row shifts read it.
    scr_ref[0:W, :] = jnp.zeros((W, C), jnp.float32)
    scr_ref[W + HW:2 * W + HW, :] = jnp.zeros((W, C), jnp.float32)
    scr_ref[W:W + HW, :] = h

    taps = wtap_ref[...]                     # (9*W, C), W-border pre-masked
    acc = None
    for dy in range(3):
        # Row (+/-W) shift: aligned scratch slab; dy == 1 reuses h in registers.
        slab = h if dy == 1 else scr_ref[dy * W:dy * W + HW, :]
        for dx in range(3):
            ox = dx - 1
            # Column (+/-1) shift on the XLU; the circular wrap element lands on
            # a column the pre-masked tap already zeroes.
            v = slab if ox == 0 else pltpu.roll(slab, (-ox) % HW, axis=0)
            k = dy * 3 + dx
            c = v.reshape(H, W, C) * taps[k * W:(k + 1) * W, :]
            acc = c if acc is None else acc + c

    res = acc + bd_ref[...] + h.reshape(H, W, C)        # depthwise bias + residual
    z = _linear_gelu(res).reshape(HW, C)
    h2_ref[...] = z.astype(h2_ref.dtype)
    s = jnp.sum(z, axis=0, keepdims=True)
    ss = jnp.sum(z * z, axis=0, keepdims=True)
    st_ref[...] = jnp.concatenate([s, ss], axis=0).reshape(1, 2, -1)


def _conv2_kernel(h_ref, w_ref, b_ref, y_ref, st_ref):
    # BN2 is already folded into w_ref/b_ref on the host.
    y = jnp.dot(h_ref[...], w_ref[...],
                preferred_element_type=jnp.float32) + b_ref[...]
    y_ref[...] = y.astype(y_ref.dtype)
    s = jnp.sum(y, axis=0, keepdims=True)
    ss = jnp.sum(y * y, axis=0, keepdims=True)
    st_ref[...] = jnp.concatenate([s, ss], axis=0).reshape(1, 2, -1)


def _bn3_kernel(y_ref, s_ref, t_ref, o_ref, *, C_out):
    v = y_ref[...].astype(jnp.float32) * s_ref[...] + t_ref[...]       # BN3 apply
    o_ref[...] = v[:, :C_out]                    # write unpadded f32 output


# ------------------------------- host wrapper ---------------------------------

def mlp_forward(x, H, W, params, *, tile_m=None, lowp=True):
    """x: (B, N, C_in) with N == H*W.  Returns (B, N, C_out) float32.

    lowp=True  -> bf16 intermediates / MXU operands (performance config).
    lowp=False -> everything f32 (used for tight verification).
    """
    B, N, C_in = x.shape
    assert N == H * W
    (w1, b1, g1, be1, wd, bd, g2, be2, w2, b2, g3, be3) = params
    C_hid = w1.shape[1]
    C_out = w2.shape[1]
    M = B * N
    HW = H * W

    assert W % 8 == 0, "depthwise pass assumes W % 8 == 0 (aligned row slabs)"
    if lowp:
        assert HW % 16 == 0, "bf16 row blocks must be 16-sublane aligned"

    mxdt = jnp.bfloat16 if lowp else jnp.float32   # intermediates / MXU operands

    tm = _pick_tile(M) if tile_m is None else tile_m
    assert M % tm == 0 and (tm % (16 if lowp else 8) == 0 or tm == M)
    nt = M // tm

    # Lane-dense channel padding (padded channels are exact zeros end to end).
    Cp = _round_up(C_hid, 128)
    Op = _round_up(C_out, 128)
    w1p = _pad_last(w1, Cp).astype(mxdt)
    b1p = _pad_last(b1, Cp)
    g1p, be1p = _pad_last(g1, Cp), _pad_last(be1, Cp)
    wdp = _pad_last(wd, Cp)
    bdp = _pad_last(bd, Cp)
    g2p, be2p = _pad_last(g2, Cp), _pad_last(be2, Cp)
    w2p = jnp.pad(w2, ((0, Cp - C_hid), (0, Op - C_out)))
    b2p = _pad_last(b2, Op)
    g3p, be3p = _pad_last(g3, Op), _pad_last(be3, Op)

    x2d = x.reshape(M, C_in).astype(mxdt)
    wtap = _masked_taps(wdp, W)                    # (9W, Cp), W-border pre-masked

    cparams = pltpu.CompilerParams(dimension_semantics=("parallel",),
                                   vmem_limit_bytes=_vmem_limit_bytes())

    def _res(shape):                               # grid-resident (constant map)
        n = len(shape)
        return pl.BlockSpec(shape, lambda i, n=n: (0,) * n)

    # ---- pass 1: 1x1 conv + linearGELU, BN1 partial stats --------------------
    h1_pre, st1 = pl.pallas_call(
        _conv1_kernel,
        grid=(nt,),
        in_specs=[pl.BlockSpec((tm, C_in), lambda i: (i, 0)),
                  _res((C_in, Cp)),
                  _res((1, Cp))],
        out_specs=(pl.BlockSpec((tm, Cp), lambda i: (i, 0)),
                   pl.BlockSpec((1, 2, Cp), lambda i: (i, 0, 0))),
        out_shape=(jax.ShapeDtypeStruct((M, Cp), mxdt),
                   jax.ShapeDtypeStruct((nt, 2, Cp), jnp.float32)),
        compiler_params=cparams,
    )(x2d, w1p, b1p)
    sc1, sh1 = _bn_scale_shift(st1, M, g1p, be1p)

    # ---- pass 2: BN1 apply + depthwise 3x3 + residual + gelu, BN2 stats ------
    h2_pre, st2 = pl.pallas_call(
        functools.partial(_dw_kernel, H=H, W=W, C=Cp),
        grid=(B,),
        in_specs=[pl.BlockSpec((HW, Cp), lambda b: (b, 0)),
                  _res((1, Cp)),
                  _res((1, Cp)),
                  _res((9 * W, Cp)),
                  _res((1, Cp))],
        out_specs=(pl.BlockSpec((HW, Cp), lambda b: (b, 0)),
                   pl.BlockSpec((1, 2, Cp), lambda b: (b, 0, 0))),
        out_shape=(jax.ShapeDtypeStruct((M, Cp), mxdt),
                   jax.ShapeDtypeStruct((B, 2, Cp), jnp.float32)),
        scratch_shapes=[pltpu.VMEM((HW + 2 * W, Cp), jnp.float32)],
        compiler_params=cparams,
    )(h1_pre, sc1, sh1, wtap, bdp)
    sc2, sh2 = _bn_scale_shift(st2, M, g2p, be2p)

    # ---- BN2 folded into conv2 (exact algebra, tiny host-side ops) -----------
    w2_eff = (sc2.reshape(-1, 1) * w2p).astype(mxdt)       # (Cp, Op)
    b2_eff = sh2 @ w2p + b2p                               # (1, Op) f32

    # ---- pass 3: (BN2-folded) 1x1 conv, BN3 partial stats --------------------
    y_pre, st3 = pl.pallas_call(
        _conv2_kernel,
        grid=(nt,),
        in_specs=[pl.BlockSpec((tm, Cp), lambda i: (i, 0)),
                  _res((Cp, Op)),
                  _res((1, Op))],
        out_specs=(pl.BlockSpec((tm, Op), lambda i: (i, 0)),
                   pl.BlockSpec((1, 2, Op), lambda i: (i, 0, 0))),
        out_shape=(jax.ShapeDtypeStruct((M, Op), mxdt),
                   jax.ShapeDtypeStruct((nt, 2, Op), jnp.float32)),
        compiler_params=cparams,
    )(h2_pre, w2_eff, b2_eff)
    sc3, sh3 = _bn_scale_shift(st3, M, g3p, be3p)

    # ---- pass 4: BN3 apply, unpadded f32 output (no extra slice pass) --------
    # (input_output_aliases not used: input is bf16-padded, output f32-unpadded.)
    y = pl.pallas_call(
        functools.partial(_bn3_kernel, C_out=C_out),
        grid=(nt,),
        in_specs=[pl.BlockSpec((tm, Op), lambda i: (i, 0)),
                  _res((1, Op)),
                  _res((1, Op))],
        out_specs=pl.BlockSpec((tm, C_out), lambda i: (i, 0)),
        out_shape=jax.ShapeDtypeStruct((M, C_out), jnp.float32),
        compiler_params=cparams,
    )(y_pre, sc3, sh3)

    return y.reshape(B, N, C_out)


# ------------------------------ pure-JAX reference ----------------------------

def mlp_reference(x, H, W, params):
    B, N, C_in = x.shape
    (w1, b1, g1, be1, wd, bd, g2, be2, w2, b2, g3, be3) = params
    C_hid = w1.shape[1]
    C_out = w2.shape[1]

    def bn(x2d, gamma, beta):
        mean = jnp.mean(x2d, axis=0, keepdims=True)
        var = jnp.mean((x2d - mean) ** 2, axis=0, keepdims=True)   # biased
        return (x2d - mean) * (gamma * jax.lax.rsqrt(var + EPS)) + beta

    xh = x.reshape(B, H, W, C_in)
    h = jnp.einsum("bhwc,cd->bhwd", xh, w1) + b1.reshape(1, 1, 1, -1)
    h = _linear_gelu(h)
    h = bn(h.reshape(-1, C_hid), g1, be1).reshape(B, H, W, C_hid)

    hp = jnp.pad(h, ((0, 0), (1, 1), (1, 1), (0, 0)))
    acc = jnp.zeros_like(h)
    for dy in range(3):
        for dx in range(3):
            acc = acc + hp[:, dy:dy + H, dx:dx + W, :] * wd[dy, dx].reshape(1, 1, 1, -1)
    acc = acc + bd.reshape(1, 1, 1, -1)

    h = _linear_gelu(acc + h)
    h = bn(h.reshape(-1, C_hid), g2, be2)

    y = h @ w2 + b2
    y = bn(y, g3, be3)
    return y.reshape(B, N, C_out)


# ------------------------------------ main ------------------------------------

if __name__ == "__main__":
    B, H, W = 2, 8, 8
    N = H * W
    C_in, C_hid, C_out = 16, 32, 16   # out_features defaults to in_features

    key = jax.random.PRNGKey(0)
    ks = jax.random.split(key, 16)
    x = jax.random.normal(ks[0], (B, N, C_in), jnp.float32)

    # Deterministic synthetic parameters (PyTorch 1x1 conv weight (Cout,Cin,1,1)
    # stored transposed as (Cin,Cout); depthwise weight (C,1,3,3) as (3,3,C)).
    w1 = jax.random.normal(ks[1], (C_in, C_hid), jnp.float32) / jnp.sqrt(C_in)
    b1 = 0.1 * jax.random.normal(ks[2], (1, C_hid), jnp.float32)
    g1 = 1.0 + 0.1 * jax.random.normal(ks[3], (1, C_hid), jnp.float32)
    be1 = 0.1 * jax.random.normal(ks[4], (1, C_hid), jnp.float32)
    wd = jax.random.normal(ks[5], (3, 3, C_hid), jnp.float32) / 3.0
    bd = 0.1 * jax.random.normal(ks[6], (1, C_hid), jnp.float32)
    g2 = 1.0 + 0.1 * jax.random.normal(ks[7], (1, C_hid), jnp.float32)
    be2 = 0.1 * jax.random.normal(ks[8], (1, C_hid), jnp.float32)
    w2 = jax.random.normal(ks[9], (C_hid, C_out), jnp.float32) / jnp.sqrt(C_hid)
    b2 = 0.1 * jax.random.normal(ks[10], (1, C_out), jnp.float32)
    g3 = 1.0 + 0.1 * jax.random.normal(ks[11], (1, C_out), jnp.float32)
    be3 = 0.1 * jax.random.normal(ks[12], (1, C_out), jnp.float32)
    params = (w1, b1, g1, be1, wd, bd, g2, be2, w2, b2, g3, be3)

    ref = mlp_reference(x, H, W, params)

    # tile_m=32 forces a 4-step grid on the row-tiled passes (exercises the
    # partial-stats reduction and gives >=2 "parallel" steps per pass).
    # 1) f32 config: validates the kernel wiring (tap/roll mapping, split BN
    #    stats, BN2 folding) tightly against the straightforward reference.
    fwd32 = jax.jit(lambda xx, pp: mlp_forward(xx, H, W, pp, tile_m=32, lowp=False))
    out32 = jax.block_until_ready(fwd32(x, params))
    assert out32.shape == (B, N, C_out)
    assert jnp.allclose(out32, ref, atol=2e-3, rtol=2e-3), \
        float(jnp.max(jnp.abs(out32 - ref)))

    # 2) bf16-intermediate config (the performance configuration): the gap vs
    #    the f32 reference is exactly the deliberate bf16 rounding of the
    #    round-tripped intermediates and MXU operands.
    fwd = jax.jit(lambda xx, pp: mlp_forward(xx, H, W, pp, tile_m=32))
    out = jax.block_until_ready(fwd(x, params))
    assert out.shape == (B, N, C_out)
    assert jnp.allclose(out, ref, atol=1e-1, rtol=1e-1), \
        float(jnp.max(jnp.abs(out - ref)))

    print("KERNEL_OK")
</pallas_src>

<mosaic_0001>
module attributes {stable_mosaic.version = 11 : i64} {
  func.func @_conv1_kernel(%arg0: i32, %arg1: memref<32x16xf32, #tpu.memory_space<vmem>>, %arg2: memref<16x128xf32, #tpu.memory_space<vmem>>, %arg3: memref<1x128xf32, #tpu.memory_space<vmem>>, %arg4: memref<32x128xf32, #tpu.memory_space<vmem>>, %arg5: memref<1x2x128xf32, #tpu.memory_space<vmem>>) attributes {dimension_semantics = [#tpu.dimension_semantics<parallel>], iteration_bounds = array<i64: 4>, scalar_prefetch = 0 : i64, scratch_operands = 0 : i64, tpu.core_type = #tpu.core_type<tc>, window_params = [{transform_indices = @transform_0, window_bounds = array<i64: 32, 16>}, {pipeline_mode = #tpu.pipeline_mode<synchronous>, transform_indices = @transform_1, window_bounds = array<i64: 16, 128>}, {pipeline_mode = #tpu.pipeline_mode<synchronous>, transform_indices = @transform_2, window_bounds = array<i64: 1, 128>}, {transform_indices = @transform_3, window_bounds = array<i64: 32, 128>}, {transform_indices = @transform_4, window_bounds = array<i64: 1, 2, 128>}]} {
    %c0 = arith.constant 0 : index
    %c0_0 = arith.constant 0 : index
    %0 = vector.load %arg1[%c0, %c0_0] : memref<32x16xf32, #tpu.memory_space<vmem>>, vector<32x16xf32>
    %c0_1 = arith.constant 0 : index
    %c0_2 = arith.constant 0 : index
    %1 = vector.load %arg2[%c0_1, %c0_2] : memref<16x128xf32, #tpu.memory_space<vmem>>, vector<16x128xf32>
    %cst = arith.constant dense<0.000000e+00> : vector<32x128xf32>
    %2 = tpu.matmul %0, %1, %cst {dimension_numbers = #tpu.dot_dimension_numbers<[1], [0], [0], [1], [0, 0, 1, 1], [], []>} : vector<32x16xf32>, vector<16x128xf32>, vector<32x128xf32> -> vector<32x128xf32>
    %c0_3 = arith.constant 0 : index
    %c0_4 = arith.constant 0 : index
    %3 = vector.load %arg3[%c0_3, %c0_4] : memref<1x128xf32, #tpu.memory_space<vmem>>, vector<1x128xf32>
    %4 = vector.broadcast %3 : vector<1x128xf32> to vector<32x128xf32>
    %5 = arith.addf %2, %4 : vector<32x128xf32>
    %cst_5 = arith.constant 1.000000e+00 : f32
    %6 = vector.broadcast %cst_5 : f32 to vector<32x128xf32>
    %7 = arith.cmpf olt, %5, %6 : vector<32x128xf32>
    %cst_6 = arith.constant -3.000000e+00 : f32
    %8 = vector.broadcast %cst_6 : f32 to vector<32x128xf32>
    %9 = arith.cmpf ogt, %5, %8 : vector<32x128xf32>
    %cst_7 = arith.constant -1.000000e+00 : f32
    %10 = vector.broadcast %cst_7 : f32 to vector<32x128xf32>
    %11 = arith.cmpf ole, %5, %10 : vector<32x128xf32>
    %12 = arith.andi %9, %11 : vector<32x128xi1>
    %cst_8 = arith.constant 3.000000e+00 : f32
    %13 = vector.broadcast %cst_8 : f32 to vector<32x128xf32>
    %14 = arith.addf %5, %13 : vector<32x128xf32>
    %cst_9 = arith.constant -0.0772857666 : f32
    %15 = vector.broadcast %cst_9 : f32 to vector<32x128xf32>
    %16 = arith.mulf %15, %14 : vector<32x128xf32>
    %cst_10 = arith.constant 0.00399780273 : f32
    %17 = vector.broadcast %cst_10 : f32 to vector<32x128xf32>
    %18 = arith.subf %16, %17 : vector<32x128xf32>
    %cst_11 = arith.constant 0.000000e+00 : f32
    %19 = vector.broadcast %cst_11 : f32 to vector<32x128xf32>
    %20 = arith.select %12, %18, %19 : vector<32x128xi1>, vector<32x128xf32>
    %cst_12 = arith.constant 0.000000e+00 : f32
    %21 = vector.broadcast %cst_12 : f32 to vector<32x128xf32>
    %22 = arith.cmpf olt, %5, %21 : vector<32x128xf32>
    %cst_13 = arith.constant 0.158691406 : f32
    %cst_14 = arith.constant 0.841278076 : f32
    %23 = vector.broadcast %cst_13 : f32 to vector<32x128xf32>
    %24 = vector.broadcast %cst_14 : f32 to vector<32x128xf32>
    %25 = arith.select %22, %23, %24 : vector<32x128xi1>, vector<32x128xf32>
    %cst_15 = arith.constant -1.000000e+00 : f32
    %26 = vector.broadcast %cst_15 : f32 to vector<32x128xf32>
    %27 = arith.cmpf oge, %5, %26 : vector<32x128xf32>
    %28 = arith.andi %27, %7 : vector<32x128xi1>
    %29 = arith.mulf %25, %5 : vector<32x128xf32>
    %cst_16 = arith.constant 0.000000e+00 : f32
    %30 = vector.broadcast %cst_16 : f32 to vector<32x128xf32>
    %31 = arith.select %28, %29, %30 : vector<32x128xi1>, vector<32x128xf32>
    %cst_17 = arith.constant 3.000000e+00 : f32
    %32 = vector.broadcast %cst_17 : f32 to vector<32x128xf32>
    %33 = arith.cmpf olt, %5, %32 : vector<32x128xf32>
    %cst_18 = arith.constant 1.000000e+00 : f32
    %34 = vector.broadcast %cst_18 : f32 to vector<32x128xf32>
    %35 = arith.subf %5, %34 : vector<32x128xf32>
    %cst_19 = arith.constant 1.07728577 : f32
    %36 = vector.broadcast %cst_19 : f32 to vector<32x128xf32>
    %37 = arith.mulf %36, %35 : vector<32x128xf32>
    %cst_20 = arith.constant 0.841278076 : f32
    %38 = vector.broadcast %cst_20 : f32 to vector<32x128xf32>
    %39 = arith.addf %37, %38 : vector<32x128xf32>
    %40 = arith.select %33, %39, %5 : vector<32x128xi1>, vector<32x128xf32>
    %cst_21 = arith.constant 0.000000e+00 : f32
    %41 = vector.broadcast %cst_21 : f32 to vector<32x128xf32>
    %42 = arith.select %7, %41, %40 : vector<32x128xi1>, vector<32x128xf32>
    %43 = arith.addf %20, %31 : vector<32x128xf32>
    %44 = arith.addf %43, %42 : vector<32x128xf32>
    %c0_22 = arith.constant 0 : index
    %c0_23 = arith.constant 0 : index
    %45 = vector.load %arg4[%c0_22, %c0_23] : memref<32x128xf32, #tpu.memory_space<vmem>>, vector<32x128xf32>
    tpu.vector_store %arg4[%c0_22, %c0_23], %44 {strides = array<i32>} : memref<32x128xf32, #tpu.memory_space<vmem>>, vector<32x128xf32>,
    %cst_24 = arith.constant dense<0.000000e+00> : vector<128xf32>
    %46 = vector.multi_reduction <add>, %44, %cst_24 [0] : vector<32x128xf32> to vector<128xf32>
    %47 = vector.shape_cast %46 : vector<128xf32> to vector<1x128xf32>
    %48 = arith.mulf %44, %44 : vector<32x128xf32>
    %cst_25 = arith.constant dense<0.000000e+00> : vector<128xf32>
    %49 = vector.multi_reduction <add>, %48, %cst_25 [0] : vector<32x128xf32> to vector<128xf32>
    %50 = vector.shape_cast %49 : vector<128xf32> to vector<1x128xf32>
    %51 = tpu.concatenate %47, %50 in 0 : vector<1x128xf32>, vector<1x128xf32> -> vector<2x128xf32>
    %52 = vector.shape_cast %51 : vector<2x128xf32> to vector<1x2x128xf32>
    %c0_26 = arith.constant 0 : index
    %c0_27 = arith.constant 0 : index
    %c0_28 = arith.constant 0 : index
    %53 = vector.load %arg5[%c0_26, %c0_27, %c0_28] : memref<1x2x128xf32, #tpu.memory_space<vmem>>, vector<1x2x128xf32>
    tpu.vector_store %arg5[%c0_26, %c0_27, %c0_28], %52 {strides = array<i32>} : memref<1x2x128xf32, #tpu.memory_space<vmem>>, vector<1x2x128xf32>,
    return
  }
  func.func @transform_0(%arg0: i32) -> (i32, i32) {
    %c0_i32 = arith.constant 0 : i32
    %c0_i32_0 = arith.constant 0 : i32
    return %arg0, %c0_i32 : i32, i32
  }
  func.func @transform_1(%arg0: i32) -> (i32, i32) {
    %c0_i32 = arith.constant 0 : i32
    %c0_i32_0 = arith.constant 0 : i32
    %c0_i32_1 = arith.constant 0 : i32
    return %c0_i32, %c0_i32_0 : i32, i32
  }
  func.func @transform_2(%arg0: i32) -> (i32, i32) {
    %c0_i32 = arith.constant 0 : i32
    %c0_i32_0 = arith.constant 0 : i32
    %c0_i32_1 = arith.constant 0 : i32
    return %c0_i32, %c0_i32_0 : i32, i32
  }
  func.func @transform_3(%arg0: i32) -> (i32, i32) {
    %c0_i32 = arith.constant 0 : i32
    %c0_i32_0 = arith.constant 0 : i32
    return %arg0, %c0_i32 : i32, i32
  }
  func.func @transform_4(%arg0: i32) -> (i32, i32, i32) {
    %c0_i32 = arith.constant 0 : i32
    %c0_i32_0 = arith.constant 0 : i32
    %c0_i32_1 = arith.constant 0 : i32
    return %arg0, %c0_i32, %c0_i32_0 : i32, i32, i32
  }
}

module attributes {stable_mosaic.version = 11 : i64} {
  func.func @_dw_kernel(%arg0: i32, %arg1: memref<64x128xf32, #tpu.memory_space<vmem>>, %arg2: memref<1x128xf32, #tpu.memory_space<vmem>>, %arg3: memref<1x128xf32, #tpu.memory_space<vmem>>, %arg4: memref<72x128xf32, #tpu.memory_space<vmem>>, %arg5: memref<1x128xf32, #tpu.memory_space<vmem>>, %arg6: memref<64x128xf32, #tpu.memory_space<vmem>>, %arg7: memref<1x2x128xf32, #tpu.memory_space<vmem>>, %arg8: memref<80x128xf32, #tpu.memory_space<vmem>>) attributes {dimension_semantics = [#tpu.dimension_semantics<parallel>], iteration_bounds = array<i64: 2>, scalar_prefetch = 0 : i64, scratch_operands = 1 : i64, tpu.core_type = #tpu.core_type<tc>, window_params = [{transform_indices = @transform_0, window_bounds = array<i64: 64, 128>}, {pipeline_mode = #tpu.pipeline_mode<synchronous>, transform_indices = @transform_1, window_bounds = array<i64: 1, 128>}, {pipeline_mode = #tpu.pipeline_mode<synchronous>, transform_indices = @transform_2, window_bounds = array<i64: 1, 128>}, {pipeline_mode = #tpu.pipeline_mode<synchronous>, transform_indices = @transform_3, window_bounds = array<i64: 72, 128>}, {pipeline_mode = #tpu.pipeline_mode<synchronous>, transform_indices = @transform_4, window_bounds = array<i64: 1, 128>}, {transform_indices = @transform_5, window_bounds = array<i64: 64, 128>}, {transform_indices = @transform_6, window_bounds = array<i64: 1, 2, 128>}]} {
    %c0 = arith.constant 0 : index
    %c0_0 = arith.constant 0 : index
    %0 = vector.load %arg1[%c0, %c0_0] : memref<64x128xf32, #tpu.memory_space<vmem>>, vector<64x128xf32>
    %c0_1 = arith.constant 0 : index
    %c0_2 = arith.constant 0 : index
    %1 = vector.load %arg2[%c0_1, %c0_2] : memref<1x128xf32, #tpu.memory_space<vmem>>, vector<1x128xf32>
    %2 = vector.broadcast %1 : vector<1x128xf32> to vector<64x128xf32>
    %3 = arith.mulf %0, %2 : vector<64x128xf32>
    %c0_3 = arith.constant 0 : index
    %c0_4 = arith.constant 0 : index
    %4 = vector.load %arg3[%c0_3, %c0_4] : memref<1x128xf32, #tpu.memory_space<vmem>>, vector<1x128xf32>
    %5 = vector.broadcast %4 : vector<1x128xf32> to vector<64x128xf32>
    %6 = arith.addf %3, %5 : vector<64x128xf32>
    %cst = arith.constant 0.000000e+00 : f32
    %7 = vector.broadcast %cst : f32 to vector<8x128xf32>
    %c0_5 = arith.constant 0 : index
    %c0_6 = arith.constant 0 : index
    %8 = vector.load %arg8[%c0_5, %c0_6] : memref<80x128xf32, #tpu.memory_space<vmem>>, vector<8x128xf32>
    tpu.vector_store %arg8[%c0_5, %c0_6], %7 {strides = array<i32>} : memref<80x128xf32, #tpu.memory_space<vmem>>, vector<8x128xf32>,
    %cst_7 = arith.constant 0.000000e+00 : f32
    %9 = vector.broadcast %cst_7 : f32 to vector<8x128xf32>
    %c72 = arith.constant 72 : index
    %c0_8 = arith.constant 0 : index
    %10 = vector.load %arg8[%c72, %c0_8] : memref<80x128xf32, #tpu.memory_space<vmem>>, vector<8x128xf32>
    tpu.vector_store %arg8[%c72, %c0_8], %9 {strides = array<i32>} : memref<80x128xf32, #tpu.memory_space<vmem>>, vector<8x128xf32>,
    %c8 = arith.constant 8 : index
    %c0_9 = arith.constant 0 : index
    %11 = vector.load %arg8[%c8, %c0_9] : memref<80x128xf32, #tpu.memory_space<vmem>>, vector<64x128xf32>
    tpu.vector_store %arg8[%c8, %c0_9], %6 {strides = array<i32>} : memref<80x128xf32, #tpu.memory_space<vmem>>, vector<64x128xf32>,
    %c0_10 = arith.constant 0 : index
    %c0_11 = arith.constant 0 : index
    %12 = vector.load %arg4[%c0_10, %c0_11] : memref<72x128xf32, #tpu.memory_space<vmem>>, vector<72x128xf32>
    %c0_12 = arith.constant 0 : index
    %c0_13 = arith.constant 0 : index
    %13 = vector.load %arg8[%c0_12, %c0_13] : memref<80x128xf32, #tpu.memory_space<vmem>>, vector<64x128xf32>
    %c1_i32 = arith.constant 1 : i32
    %14 = tpu.dynamic_rotate %13 by %c1_i32 dim 0 : vector<64x128xf32>, i32 -> vector<64x128xf32>
    %15 = vector.shape_cast %14 : vector<64x128xf32> to vector<8x8x128xf32>
    %16 = vector.extract_strided_slice %12 {offsets = [0, 0], sizes = [8, 128], strides = [1, 1]} : vector<72x128xf32> to vector<8x128xf32>
    %17 = vector.shape_cast %16 : vector<8x128xf32> to vector<1x8x128xf32>
    %18 = vector.broadcast %17 : vector<1x8x128xf32> to vector<8x8x128xf32>
    %19 = arith.mulf %15, %18 : vector<8x8x128xf32>
    %20 = vector.shape_cast %13 : vector<64x128xf32> to vector<8x8x128xf32>
    %21 = vector.extract_strided_slice %12 {offsets = [8, 0], sizes = [8, 128], strides = [1, 1]} : vector<72x128xf32> to vector<8x128xf32>
    %22 = vector.shape_cast %21 : vector<8x128xf32> to vector<1x8x128xf32>
    %23 = vector.broadcast %22 : vector<1x8x128xf32> to vector<8x8x128xf32>
    %24 = arith.mulf %20, %23 : vector<8x8x128xf32>
    %25 = arith.addf %19, %24 : vector<8x8x128xf32>
    %c63_i32 = arith.constant 63 : i32
    %26 = tpu.dynamic_rotate %13 by %c63_i32 dim 0 : vector<64x128xf32>, i32 -> vector<64x128xf32>
    %27 = vector.shape_cast %26 : vector<64x128xf32> to vector<8x8x128xf32>
    %28 = vector.extract_strided_slice %12 {offsets = [16, 0], sizes = [8, 128], strides = [1, 1]} : vector<72x128xf32> to vector<8x128xf32>
    %29 = vector.shape_cast %28 : vector<8x128xf32> to vector<1x8x128xf32>
    %30 = vector.broadcast %29 : vector<1x8x128xf32> to vector<8x8x128xf32>
    %31 = arith.mulf %27, %30 : vector<8x8x128xf32>
    %32 = arith.addf %25, %31 : vector<8x8x128xf32>
    %c1_i32_14 = arith.constant 1 : i32
    %33 = tpu.dynamic_rotate %6 by %c1_i32_14 dim 0 : vector<64x128xf32>, i32 -> vector<64x128xf32>
    %34 = vector.shape_cast %33 : vector<64x128xf32> to vector<8x8x128xf32>
    %35 = vector.extract_strided_slice %12 {offsets = [24, 0], sizes = [8, 128], strides = [1, 1]} : vector<72x128xf32> to vector<8x128xf32>
    %36 = vector.shape_cast %35 : vector<8x128xf32> to vector<1x8x128xf32>
    %37 = vector.broadcast %36 : vector<1x8x128xf32> to vector<8x8x128xf32>
    %38 = arith.mulf %34, %37 : vector<8x8x128xf32>
    %39 = arith.addf %32, %38 : vector<8x8x128xf32>
    %40 = vector.shape_cast %6 : vector<64x128xf32> to vector<8x8x128xf32>
    %41 = vector.extract_strided_slice %12 {offsets = [32, 0], sizes = [8, 128], strides = [1, 1]} : vector<72x128xf32> to vector<8x128xf32>
    %42 = vector.shape_cast %41 : vector<8x128xf32> to vector<1x8x128xf32>
    %43 = vector.broadcast %42 : vector<1x8x128xf32> to vector<8x8x128xf32>
    %44 = arith.mulf %40, %43 : vector<8x8x128xf32>
    %45 = arith.addf %39, %44 : vector<8x8x128xf32>
    %c63_i32_15 = arith.constant 63 : i32
    %46 = tpu.dynamic_rotate %6 by %c63_i32_15 dim 0 : vector<64x128xf32>, i32 -> vector<64x128xf32>
    %47 = vector.shape_cast %46 : vector<64x128xf32> to vector<8x8x128xf32>
    %48 = vector.extract_strided_slice %12 {offsets = [40, 0], sizes = [8, 128], strides = [1, 1]} : vector<72x128xf32> to vector<8x128xf32>
    %49 = vector.shape_cast %48 : vector<8x128xf32> to vector<1x8x128xf32>
    %50 = vector.broadcast %49 : vector<1x8x128xf32> to vector<8x8x128xf32>
    %51 = arith.mulf %47, %50 : vector<8x8x128xf32>
    %52 = arith.addf %45, %51 : vector<8x8x128xf32>
    %c16 = arith.constant 16 : index
    %c0_16 = arith.constant 0 : index
    %53 = vector.load %arg8[%c16, %c0_16] : memref<80x128xf32, #tpu.memory_space<vmem>>, vector<64x128xf32>
    %c1_i32_17 = arith.constant 1 : i32
    %54 = tpu.dynamic_rotate %53 by %c1_i32_17 dim 0 : vector<64x128xf32>, i32 -> vector<64x128xf32>
    %55 = vector.shape_cast %54 : vector<64x128xf32> to vector<8x8x128xf32>
    %56 = vector.extract_strided_slice %12 {offsets = [48, 0], sizes = [8, 128], strides = [1, 1]} : vector<72x128xf32> to vector<8x128xf32>
    %57 = vector.shape_cast %56 : vector<8x128xf32> to vector<1x8x128xf32>
    %58 = vector.broadcast %57 : vector<1x8x128xf32> to vector<8x8x128xf32>
    %59 = arith.mulf %55, %58 : vector<8x8x128xf32>
    %60 = arith.addf %52, %59 : vector<8x8x128xf32>
    %61 = vector.shape_cast %53 : vector<64x128xf32> to vector<8x8x128xf32>
    %62 = vector.extract_strided_slice %12 {offsets = [56, 0], sizes = [8, 128], strides = [1, 1]} : vector<72x128xf32> to vector<8x128xf32>
    %63 = vector.shape_cast %62 : vector<8x128xf32> to vector<1x8x128xf32>
    %64 = vector.broadcast %63 : vector<1x8x128xf32> to vector<8x8x128xf32>
    %65 = arith.mulf %61, %64 : vector<8x8x128xf32>
    %66 = arith.addf %60, %65 : vector<8x8x128xf32>
    %c63_i32_18 = arith.constant 63 : i32
    %67 = tpu.dynamic_rotate %53 by %c63_i32_18 dim 0 : vector<64x128xf32>, i32 -> vector<64x128xf32>
    %68 = vector.shape_cast %67 : vector<64x128xf32> to vector<8x8x128xf32>
    %69 = vector.extract_strided_slice %12 {offsets = [64, 0], sizes = [8, 128], strides = [1, 1]} : vector<72x128xf32> to vector<8x128xf32>
    %70 = vector.shape_cast %69 : vector<8x128xf32> to vector<1x8x128xf32>
    %71 = vector.broadcast %70 : vector<1x8x128xf32> to vector<8x8x128xf32>
    %72 = arith.mulf %68, %71 : vector<8x8x128xf32>
    %73 = arith.addf %66, %72 : vector<8x8x128xf32>
    %c0_19 = arith.constant 0 : index
    %c0_20 = arith.constant 0 : index
    %74 = vector.load %arg5[%c0_19, %c0_20] : memref<1x128xf32, #tpu.memory_space<vmem>>, vector<1x128xf32>
    %75 = vector.shape_cast %74 : vector<1x128xf32> to vector<1x1x128xf32>
    %76 = vector.broadcast %75 : vector<1x1x128xf32> to vector<8x8x128xf32>
    %77 = arith.addf %73, %76 : vector<8x8x128xf32>
    %78 = vector.shape_cast %6 : vector<64x128xf32> to vector<8x8x128xf32>
    %79 = arith.addf %77, %78 : vector<8x8x128xf32>
    %cst_21 = arith.constant 1.000000e+00 : f32
    %80 = vector.broadcast %cst_21 : f32 to vector<8x8x128xf32>
    %81 = arith.cmpf olt, %79, %80 : vector<8x8x128xf32>
    %cst_22 = arith.constant -3.000000e+00 : f32
    %82 = vector.broadcast %cst_22 : f32 to vector<8x8x128xf32>
    %83 = arith.cmpf ogt, %79, %82 : vector<8x8x128xf32>
    %cst_23 = arith.constant -1.000000e+00 : f32
    %84 = vector.broadcast %cst_23 : f32 to vector<8x8x128xf32>
    %85 = arith.cmpf ole, %79, %84 : vector<8x8x128xf32>
    %86 = arith.andi %83, %85 : vector<8x8x128xi1>
    %cst_24 = arith.constant 3.000000e+00 : f32
    %87 = vector.broadcast %cst_24 : f32 to vector<8x8x128xf32>
    %88 = arith.addf %79, %87 : vector<8x8x128xf32>
    %cst_25 = arith.constant -0.0772857666 : f32
    %89 = vector.broadcast %cst_25 : f32 to vector<8x8x128xf32>
    %90 = arith.mulf %89, %88 : vector<8x8x128xf32>
    %cst_26 = arith.constant 0.00399780273 : f32
    %91 = vector.broadcast %cst_26 : f32 to vector<8x8x128xf32>
    %92 = arith.subf %90, %91 : vector<8x8x128xf32>
    %cst_27 = arith.constant 0.000000e+00 : f32
    %93 = vector.broadcast %cst_27 : f32 to vector<8x8x128xf32>
    %94 = arith.select %86, %92, %93 : vector<8x8x128xi1>, vector<8x8x128xf32>
    %cst_28 = arith.constant 0.000000e+00 : f32
    %95 = vector.broadcast %cst_28 : f32 to vector<8x8x128xf32>
    %96 = arith.cmpf olt, %79, %95 : vector<8x8x128xf32>
    %cst_29 = arith.constant 0.158691406 : f32
    %cst_30 = arith.constant 0.841278076 : f32
    %97 = vector.broadcast %cst_29 : f32 to vector<8x8x128xf32>
    %98 = vector.broadcast %cst_30 : f32 to vector<8x8x128xf32>
    %99 = arith.select %96, %97, %98 : vector<8x8x128xi1>, vector<8x8x128xf32>
    %cst_31 = arith.constant -1.000000e+00 : f32
    %100 = vector.broadcast %cst_31 : f32 to vector<8x8x128xf32>
    %101 = arith.cmpf oge, %79, %100 : vector<8x8x128xf32>
    %102 = arith.andi %101, %81 : vector<8x8x128xi1>
    %103 = arith.mulf %99, %79 : vector<8x8x128xf32>
    %cst_32 = arith.constant 0.000000e+00 : f32
    %104 = vector.broadcast %cst_32 : f32 to vector<8x8x128xf32>
    %105 = arith.select %102, %103, %104 : vector<8x8x128xi1>, vector<8x8x128xf32>
    %cst_33 = arith.constant 3.000000e+00 : f32
    %106 = vector.broadcast %cst_33 : f32 to vector<8x8x128xf32>
    %107 = arith.cmpf olt, %79, %106 : vector<8x8x128xf32>
    %cst_34 = arith.constant 1.000000e+00 : f32
    %108 = vector.broadcast %cst_34 : f32 to vector<8x8x128xf32>
    %109 = arith.subf %79, %108 : vector<8x8x128xf32>
    %cst_35 = arith.constant 1.07728577 : f32
    %110 = vector.broadcast %cst_35 : f32 to vector<8x8x128xf32>
    %111 = arith.mulf %110, %109 : vector<8x8x128xf32>
    %cst_36 = arith.constant 0.841278076 : f32
    %112 = vector.broadcast %cst_36 : f32 to vector<8x8x128xf32>
    %113 = arith.addf %111, %112 : vector<8x8x128xf32>
    %114 = arith.select %107, %113, %79 : vector<8x8x128xi1>, vector<8x8x128xf32>
    %cst_37 = arith.constant 0.000000e+00 : f32
    %115 = vector.broadcast %cst_37 : f32 to vector<8x8x128xf32>
    %116 = arith.select %81, %115, %114 : vector<8x8x128xi1>, vector<8x8x128xf32>
    %117 = arith.addf %94, %105 : vector<8x8x128xf32>
    %118 = arith.addf %117, %116 : vector<8x8x128xf32>
    %119 = vector.shape_cast %118 : vector<8x8x128xf32> to vector<64x128xf32>
    %c0_38 = arith.constant 0 : index
    %c0_39 = arith.constant 0 : index
    %120 = vector.load %arg6[%c0_38, %c0_39] : memref<64x128xf32, #tpu.memory_space<vmem>>, vector<64x128xf32>
    tpu.vector_store %arg6[%c0_38, %c0_39], %119 {strides = array<i32>} : memref<64x128xf32, #tpu.memory_space<vmem>>, vector<64x128xf32>,
    %cst_40 = arith.constant dense<0.000000e+00> : vector<128xf32>
    %121 = vector.multi_reduction <add>, %119, %cst_40 [0] : vector<64x128xf32> to vector<128xf32>
    %122 = vector.shape_cast %121 : vector<128xf32> to vector<1x128xf32>
    %123 = arith.mulf %119, %119 : vector<64x128xf32>
    %cst_41 = arith.constant dense<0.000000e+00> : vector<128xf32>
    %124 = vector.multi_reduction <add>, %123, %cst_41 [0] : vector<64x128xf32> to vector<128xf32>
    %125 = vector.shape_cast %124 : vector<128xf32> to vector<1x128xf32>
    %126 = tpu.concatenate %122, %125 in 0 : vector<1x128xf32>, vector<1x128xf32> -> vector<2x128xf32>
    %127 = vector.shape_cast %126 : vector<2x128xf32> to vector<1x2x128xf32>
    %c0_42 = arith.constant 0 : index
    %c0_43 = arith.constant 0 : index
    %c0_44 = arith.constant 0 : index
    %128 = vector.load %arg7[%c0_42, %c0_43, %c0_44] : memref<1x2x128xf32, #tpu.memory_space<vmem>>, vector<1x2x128xf32>
    tpu.vector_store %arg7[%c0_42, %c0_43, %c0_44], %127 {strides = array<i32>} : memref<1x2x128xf32, #tpu.memory_space<vmem>>, vector<1x2x128xf32>,
    return
  }
  func.func @transform_0(%arg0: i32) -> (i32, i32) {
    %c0_i32 = arith.constant 0 : i32
    %c0_i32_0 = arith.constant 0 : i32
    return %arg0, %c0_i32 : i32, i32
  }
  func.func @transform_1(%arg0: i32) -> (i32, i32) {
    %c0_i32 = arith.constant 0 : i32
    %c0_i32_0 = arith.constant 0 : i32
    %c0_i32_1 = arith.constant 0 : i32
    return %c0_i32, %c0_i32_0 : i32, i32
  }
  func.func @transform_2(%arg0: i32) -> (i32, i32) {
    %c0_i32 = arith.constant 0 : i32
    %c0_i32_0 = arith.constant 0 : i32
    %c0_i32_1 = arith.constant 0 : i32
    return %c0_i32, %c0_i32_0 : i32, i32
  }
  func.func @transform_3(%arg0: i32) -> (i32, i32) {
    %c0_i32 = arith.constant 0 : i32
    %c0_i32_0 = arith.constant 0 : i32
    %c0_i32_1 = arith.constant 0 : i32
    return %c0_i32, %c0_i32_0 : i32, i32
  }
  func.func @transform_4(%arg0: i32) -> (i32, i32) {
    %c0_i32 = arith.constant 0 : i32
    %c0_i32_0 = arith.constant 0 : i32
    %c0_i32_1 = arith.constant 0 : i32
    return %c0_i32, %c0_i32_0 : i32, i32
  }
  func.func @transform_5(%arg0: i32) -> (i32, i32) {
    %c0_i32 = arith.constant 0 : i32
    %c0_i32_0 = arith.constant 0 : i32
    return %arg0, %c0_i32 : i32, i32
  }
  func.func @transform_6(%arg0: i32) -> (i32, i32, i32) {
    %c0_i32 = arith.constant 0 : i32
    %c0_i32_0 = arith.constant 0 : i32
    %c0_i32_1 = arith.constant 0 : i32
    return %arg0, %c0_i32, %c0_i32_0 : i32, i32, i32
  }
}

module attributes {stable_mosaic.version = 11 : i64} {
  func.func @_conv2_kernel(%arg0: i32, %arg1: memref<32x128xf32, #tpu.memory_space<vmem>>, %arg2: memref<128x128xf32, #tpu.memory_space<vmem>>, %arg3: memref<1x128xf32, #tpu.memory_space<vmem>>, %arg4: memref<32x128xf32, #tpu.memory_space<vmem>>, %arg5: memref<1x2x128xf32, #tpu.memory_space<vmem>>) attributes {dimension_semantics = [#tpu.dimension_semantics<parallel>], iteration_bounds = array<i64: 4>, scalar_prefetch = 0 : i64, scratch_operands = 0 : i64, tpu.core_type = #tpu.core_type<tc>, window_params = [{transform_indices = @transform_0, window_bounds = array<i64: 32, 128>}, {pipeline_mode = #tpu.pipeline_mode<synchronous>, transform_indices = @transform_1, window_bounds = array<i64: 128, 128>}, {pipeline_mode = #tpu.pipeline_mode<synchronous>, transform_indices = @transform_2, window_bounds = array<i64: 1, 128>}, {transform_indices = @transform_3, window_bounds = array<i64: 32, 128>}, {transform_indices = @transform_4, window_bounds = array<i64: 1, 2, 128>}]} {
    %c0 = arith.constant 0 : index
    %c0_0 = arith.constant 0 : index
    %0 = vector.load %arg1[%c0, %c0_0] : memref<32x128xf32, #tpu.memory_space<vmem>>, vector<32x128xf32>
    %c0_1 = arith.constant 0 : index
    %c0_2 = arith.constant 0 : index
    %1 = vector.load %arg2[%c0_1, %c0_2] : memref<128x128xf32, #tpu.memory_space<vmem>>, vector<128x128xf32>
    %cst = arith.constant dense<0.000000e+00> : vector<32x128xf32>
    %2 = tpu.matmul %0, %1, %cst {dimension_numbers = #tpu.dot_dimension_numbers<[1], [0], [0], [1], [0, 0, 1, 1], [], []>} : vector<32x128xf32>, vector<128x128xf32>, vector<32x128xf32> -> vector<32x128xf32>
    %c0_3 = arith.constant 0 : index
    %c0_4 = arith.constant 0 : index
    %3 = vector.load %arg3[%c0_3, %c0_4] : memref<1x128xf32, #tpu.memory_space<vmem>>, vector<1x128xf32>
    %4 = vector.broadcast %3 : vector<1x128xf32> to vector<32x128xf32>
    %5 = arith.addf %2, %4 : vector<32x128xf32>
    %c0_5 = arith.constant 0 : index
    %c0_6 = arith.constant 0 : index
    %6 = vector.load %arg4[%c0_5, %c0_6] : memref<32x128xf32, #tpu.memory_space<vmem>>, vector<32x128xf32>
    tpu.vector_store %arg4[%c0_5, %c0_6], %5 {strides = array<i32>} : memref<32x128xf32, #tpu.memory_space<vmem>>, vector<32x128xf32>,
    %cst_7 = arith.constant dense<0.000000e+00> : vector<128xf32>
    %7 = vector.multi_reduction <add>, %5, %cst_7 [0] : vector<32x128xf32> to vector<128xf32>
    %8 = vector.shape_cast %7 : vector<128xf32> to vector<1x128xf32>
    %9 = arith.mulf %5, %5 : vector<32x128xf32>
    %cst_8 = arith.constant dense<0.000000e+00> : vector<128xf32>
    %10 = vector.multi_reduction <add>, %9, %cst_8 [0] : vector<32x128xf32> to vector<128xf32>
    %11 = vector.shape_cast %10 : vector<128xf32> to vector<1x128xf32>
    %12 = tpu.concatenate %8, %11 in 0 : vector<1x128xf32>, vector<1x128xf32> -> vector<2x128xf32>
    %13 = vector.shape_cast %12 : vector<2x128xf32> to vector<1x2x128xf32>
    %c0_9 = arith.constant 0 : index
    %c0_10 = arith.constant 0 : index
    %c0_11 = arith.constant 0 : index
    %14 = vector.load %arg5[%c0_9, %c0_10, %c0_11] : memref<1x2x128xf32, #tpu.memory_space<vmem>>, vector<1x2x128xf32>
    tpu.vector_store %arg5[%c0_9, %c0_10, %c0_11], %13 {strides = array<i32>} : memref<1x2x128xf32, #tpu.memory_space<vmem>>, vector<1x2x128xf32>,
    return
  }
  func.func @transform_0(%arg0: i32) -> (i32, i32) {
    %c0_i32 = arith.constant 0 : i32
    %c0_i32_0 = arith.constant 0 : i32
    return %arg0, %c0_i32 : i32, i32
  }
  func.func @transform_1(%arg0: i32) -> (i32, i32) {
    %c0_i32 = arith.constant 0 : i32
    %c0_i32_0 = arith.constant 0 : i32
    %c0_i32_1 = arith.constant 0 : i32
    return %c0_i32, %c0_i32_0 : i32, i32
  }
  func.func @transform_2(%arg0: i32) -> (i32, i32) {
    %c0_i32 = arith.constant 0 : i32
    %c0_i32_0 = arith.constant 0 : i32
    %c0_i32_1 = arith.constant 0 : i32
    return %c0_i32, %c0_i32_0 : i32, i32
  }
  func.func @transform_3(%arg0: i32) -> (i32, i32) {
    %c0_i32 = arith.constant 0 : i32
    %c0_i32_0 = arith.constant 0 : i32
    return %arg0, %c0_i32 : i32, i32
  }
  func.func @transform_4(%arg0: i32) -> (i32, i32, i32) {
    %c0_i32 = arith.constant 0 : i32
    %c0_i32_0 = arith.constant 0 : i32
    %c0_i32_1 = arith.constant 0 : i32
    return %arg0, %c0_i32, %c0_i32_0 : i32, i32, i32
  }
}

module attributes {stable_mosaic.version = 11 : i64} {
  func.func @_bn3_kernel(%arg0: i32, %arg1: memref<32x128xf32, #tpu.memory_space<vmem>>, %arg2: memref<1x128xf32, #tpu.memory_space<vmem>>, %arg3: memref<1x128xf32, #tpu.memory_space<vmem>>, %arg4: memref<32x16xf32, #tpu.memory_space<vmem>>) attributes {dimension_semantics = [#tpu.dimension_semantics<parallel>], iteration_bounds = array<i64: 4>, scalar_prefetch = 0 : i64, scratch_operands = 0 : i64, tpu.core_type = #tpu.core_type<tc>, window_params = [{transform_indices = @transform_0, window_bounds = array<i64: 32, 128>}, {pipeline_mode = #tpu.pipeline_mode<synchronous>, transform_indices = @transform_1, window_bounds = array<i64: 1, 128>}, {pipeline_mode = #tpu.pipeline_mode<synchronous>, transform_indices = @transform_2, window_bounds = array<i64: 1, 128>}, {transform_indices = @transform_3, window_bounds = array<i64: 32, 16>}]} {
    %c0 = arith.constant 0 : index
    %c0_0 = arith.constant 0 : index
    %0 = vector.load %arg1[%c0, %c0_0] : memref<32x128xf32, #tpu.memory_space<vmem>>, vector<32x128xf32>
    %c0_1 = arith.constant 0 : index
    %c0_2 = arith.constant 0 : index
    %1 = vector.load %arg2[%c0_1, %c0_2] : memref<1x128xf32, #tpu.memory_space<vmem>>, vector<1x128xf32>
    %2 = vector.broadcast %1 : vector<1x128xf32> to vector<32x128xf32>
    %3 = arith.mulf %0, %2 : vector<32x128xf32>
    %c0_3 = arith.constant 0 : index
    %c0_4 = arith.constant 0 : index
    %4 = vector.load %arg3[%c0_3, %c0_4] : memref<1x128xf32, #tpu.memory_space<vmem>>, vector<1x128xf32>
    %5 = vector.broadcast %4 : vector<1x128xf32> to vector<32x128xf32>
    %6 = arith.addf %3, %5 : vector<32x128xf32>
    %7 = vector.extract_strided_slice %6 {offsets = [0, 0], sizes = [32, 16], strides = [1, 1]} : vector<32x128xf32> to vector<32x16xf32>
    %c0_5 = arith.constant 0 : index
    %c0_6 = arith.constant 0 : index
    %8 = vector.load %arg4[%c0_5, %c0_6] : memref<32x16xf32, #tpu.memory_space<vmem>>, vector<32x16xf32>
    tpu.vector_store %arg4[%c0_5, %c0_6], %7 {strides = array<i32>} : memref<32x16xf32, #tpu.memory_space<vmem>>, vector<32x16xf32>,
    return
  }
  func.func @transform_0(%arg0: i32) -> (i32, i32) {
    %c0_i32 = arith.constant 0 : i32
    %c0_i32_0 = arith.constant 0 : i32
    return %arg0, %c0_i32 : i32, i32
  }
  func.func @transform_1(%arg0: i32) -> (i32, i32) {
    %c0_i32 = arith.constant 0 : i32
    %c0_i32_0 = arith.constant 0 : i32
    %c0_i32_1 = arith.constant 0 : i32
    return %c0_i32, %c0_i32_0 : i32, i32
  }
  func.func @transform_2(%arg0: i32) -> (i32, i32) {
    %c0_i32 = arith.constant 0 : i32
    %c0_i32_0 = arith.constant 0 : i32
    %c0_i32_1 = arith.constant 0 : i32
    return %c0_i32, %c0_i32_0 : i32, i32
  }
  func.func @transform_3(%arg0: i32) -> (i32, i32) {
    %c0_i32 = arith.constant 0 : i32
    %c0_i32_0 = arith.constant 0 : i32
    return %arg0, %c0_i32 : i32, i32
  }
}

</mosaic_0001>

<llo_original>
// kernel: _lambda_.7
$region0: #{_lambda_.7}
  #allocation0 [shape = 'u32[]', space=smem, size = 0x4, offset = 0x4, fixed_abs, tag = 'smem constant byte address 0x4 - core index']
  #allocation1 [shape = 'u32[72,128]{1,0:T(1,128)}', space=vmem, size = 0x9000, scoped, tag = 'internal scratch']
  %s0 = inlined_call_operand.vmem [shape: f32[128,128], index: 0, kind: input, shape index: {}]
  %s1 = inlined_call_operand.vmem [shape: f32[1,128], index: 1, kind: input, shape index: {}]
  %s2 = inlined_call_operand.vmem [shape: f32[1,128], index: 2, kind: input, shape index: {}]
  %s3 = inlined_call_operand.vmem [shape: f32[128,16], index: 3, kind: output, shape index: {}]
  %s4 = sld [smem:[#allocation0]]
  $region45: #{_lambda_.7} parent=0
    _
  %s6 = ssub.s32 1, %s4
  %s7 = scalar_select 0, %s6, %s4
  loop: start=0, step=1, limit=6
  $region2: #{_lambda_.7} parent=0 // loop_pre_header
    _
  $region3: #{_lambda_.7} parent=0 // loop_header
    %s9 = sphi 0, %s13
    %p10 = scmp.ge.s32.totalorder %s9, 6
    %s19 = sphi 0, %s21
    %s22 = sphi 0, %s19
    %s23 = sphi 0, %s22
    %s39 = sphi 0, %s23
    %s43 = sphi 0, %s43
    %s45 = sphi 0, %s43
    %s46 = sphi 0, %s45
    %s60 = sphi 0, %s46
    %s64 = sphi 0, %s64
    %s66 = sphi 0, %s64
    %s67 = sphi 0, %s66
    %s81 = sphi 0, %s67
    %s87 = sphi 0, %s89
    %s90 = sphi 0, %s87
    %s91 = sphi 0, %s90
    %s107 = sphi 0, %s91
  $region4: #{_lambda_.7} parent=0 // loop_header_branch
    %12 = sbr.rel (%p10) target = $region8
  $region5: #{_lambda_.7} parent=0 // loop_body
    %s14 = ssub.s32 %s9, 1
    %s15 = ssub.s32 %s9, 2
    %s16 = sadd.s32 %s9, 1
    %s17 = ssub.s32 %s9, %s16
    %p18 = scmp.eq.s32.totalorder %s17, 0
    %s20 = sadd.s32 %s19, 1
    %s21 = scalar_select %p18, %s19, %s20
    %p24 = pneg %p18
    %p25 = scmp.eq.s32.totalorder %s9, 3
    %p26 = por %p24, %p25
    %p27 = scmp.ne.s32.totalorder %s19, %s22
    %p28 = scmp.eq.s32.totalorder %s9, 0
    %p29 = por %p27, %p28
    %p30 = scmp.ne.s32.totalorder %s19, %s22
    %p31 = scmp.eq.s32.totalorder %s14, 3
    %p32 = por %p30, %p31
    %p33 = scmp.ne.s32.totalorder %s22, %s23
    %p34 = scmp.eq.s32.totalorder %s14, 0
    %p35 = por %p33, %p34
    %p36 = scmp.ne.s32.totalorder %s22, %s23
    %p37 = scmp.eq.s32.totalorder %s15, 3
    %p38 = por %p36, %p37
    %p40 = scmp.ne.s32.totalorder %s23, %s39
    %p41 = scmp.eq.s32.totalorder %s15, 0
    %p42 = por %p40, %p41
    %s44 = sadd.s32 %s43, 1
    %p47 = scmp.eq.s32.totalorder %s9, 3
    %p48 = scmp.ne.s32.totalorder %s43, %s45
    %p49 = scmp.eq.s32.totalorder %s9, 0
    %p50 = por %p48, %p49
    %p51 = scmp.ne.s32.totalorder %s43, %s45
    %p52 = scmp.eq.s32.totalorder %s14, 3
    %p53 = por %p51, %p52
    %p54 = scmp.ne.s32.totalorder %s45, %s46
    %p55 = scmp.eq.s32.totalorder %s14, 0
    %p56 = por %p54, %p55
    %p57 = scmp.ne.s32.totalorder %s45, %s46
    %p58 = scmp.eq.s32.totalorder %s15, 3
    %p59 = por %p57, %p58
    %p61 = scmp.ne.s32.totalorder %s46, %s60
    %p62 = scmp.eq.s32.totalorder %s15, 0
    %p63 = por %p61, %p62
    %s65 = sadd.s32 %s64, 1
    %p68 = scmp.eq.s32.totalorder %s9, 3
    %p69 = scmp.ne.s32.totalorder %s64, %s66
    %p70 = scmp.eq.s32.totalorder %s9, 0
    %p71 = por %p69, %p70
    %p72 = scmp.ne.s32.totalorder %s64, %s66
    %p73 = scmp.eq.s32.totalorder %s14, 3
    %p74 = por %p72, %p73
    %p75 = scmp.ne.s32.totalorder %s66, %s67
    %p76 = scmp.eq.s32.totalorder %s14, 0
    %p77 = por %p75, %p76
    %p78 = scmp.ne.s32.totalorder %s66, %s67
    %p79 = scmp.eq.s32.totalorder %s15, 3
    %p80 = por %p78, %p79
    %p82 = scmp.ne.s32.totalorder %s67, %s81
    %p83 = scmp.eq.s32.totalorder %s15, 0
    %p84 = por %p82, %p83
    %s85 = ssub.s32 %s9, %s16
    %p86 = scmp.eq.s32.totalorder %s85, 0
    %s88 = sadd.s32 %s87, 1
    %s89 = scalar_select %p86, %s87, %s88
    %p92 = pneg %p86
    %p93 = scmp.eq.s32.totalorder %s9, 3
    %p94 = por %p92, %p93
    %p95 = scmp.ne.s32.totalorder %s87, %s90
    %p96 = scmp.eq.s32.totalorder %s9, 0
    %p97 = por %p95, %p96
    %p98 = scmp.ne.s32.totalorder %s87, %s90
    %p99 = scmp.eq.s32.totalorder %s14, 3
    %p100 = por %p98, %p99
    %p101 = scmp.ne.s32.totalorder %s90, %s91
    %p102 = scmp.eq.s32.totalorder %s14, 0
    %p103 = por %p101, %p102
    %p104 = scmp.ne.s32.totalorder %s90, %s91
    %p105 = scmp.eq.s32.totalorder %s15, 3
    %p106 = por %p104, %p105
    %p108 = scmp.ne.s32.totalorder %s91, %s107
    %p109 = scmp.eq.s32.totalorder %s15, 0
    %p110 = por %p108, %p109
    %p111 = scmp.le.s32.totalorder 1, %s9
    %p112 = scmp.lt.s32.totalorder %s9, 5
    %p113 = pnand %p111, %p112
    %p114 = pneg %p113
    // Predicated region
    $region9: #{_lambda_.7} parent=5 // pred_check
      _
    $region10: #{_lambda_.7} parent=5 // pred_check_branch
      %116 = sbr.rel (%p113) target = $region12
    $region11: #{_lambda_.7} parent=5 // pred_region
      %s117 = ssub.s32 %s9, 1
      // Predicated region
      $region13: #{_lambda_.7} parent=11 // pred_check
        %p118 = pneg %p56
      $region14: #{_lambda_.7} parent=11 // pred_check_branch
        %120 = sbr.rel (%p118) target = $region16
      $region15: #{_lambda_.7} parent=11 // pred_region
        _
      $region16: #{_lambda_.7} parent=11 // pred_fallthru
        _
      // Predicated region
      $region17: #{_lambda_.7} parent=11 // pred_check
        %p121 = pneg %p77
      $region18: #{_lambda_.7} parent=11 // pred_check_branch
        %123 = sbr.rel (%p121) target = $region20
      $region19: #{_lambda_.7} parent=11 // pred_region
        _
      $region20: #{_lambda_.7} parent=11 // pred_fallthru
        _
    $region12: #{_lambda_.7} parent=5 // pred_fallthru
      _
    %p124 = scmp.lt.s32.totalorder %s9, 4
    // Predicated region
    $region21: #{_lambda_.7} parent=5 // pred_check
      %p125 = pneg %p124
    $region22: #{_lambda_.7} parent=5 // pred_check_branch
      %127 = sbr.rel (%p125) target = $region24
    $region23: #{_lambda_.7} parent=5 // pred_region
      // Predicated region
      $region25: #{_lambda_.7} parent=23 // pred_check
        %p128 = pneg %p29
      $region26: #{_lambda_.7} parent=23 // pred_check_branch
        %130 = sbr.rel (%p128) target = $region28
      $region27: #{_lambda_.7} parent=23 // pred_region
        %s131 = smul.u32 4, %s9
        %p132 = scmp.lt.s32.totalorder %s131, 15
        %s133 = scalar_select %p132, %s131, 15
        %s134 = smul.addr %s133, 8
        %s135 = scalar_lea.vmem %s0, %s134
        %s136 = smul.u32 4, %s9
      $region28: #{_lambda_.7} parent=23 // pred_fallthru
        _
    $region24: #{_lambda_.7} parent=5 // pred_fallthru
      _
    %p137 = scmp.le.s32.totalorder 1, %s9
    %p138 = scmp.lt.s32.totalorder %s9, 5
    %p139 = pnand %p137, %p138
    %p140 = pneg %p139
    // Predicated region
    $region29: #{_lambda_.7} parent=5 // pred_check
      _
    $region30: #{_lambda_.7} parent=5 // pred_check_branch
      %142 = sbr.rel (%p139) target = $region32
    $region31: #{_lambda_.7} parent=5 // pred_region
      %s143 = ssub.s32 %s9, 1
      %s144 = smul.u32 4, %s14
      %p145 = scmp.lt.s32.totalorder %s144, 15
      %s146 = scalar_select %p145, %s144, 15
      %s147 = smul.addr %s146, 8
      %s148 = scalar_lea.vmem %s0, %s147
      %p149 = pneg %p35
      %p150 = pneg %p32
      %p151 = pneg %p56
      %p152 = pneg %p53
      %p153 = pneg %p77
      %p154 = pneg %p74
      %p155 = pneg %p103
      %p156 = pneg %p100
      %s157 = smul.u32 4, %s14
      %p158 = scmp.lt.s32.totalorder %s157, 15
      %s159 = scalar_select %p158, %s157, 15
      %s160 = smul.addr %s159, 8
      %s161 = scalar_lea.vmem %s3, %s160
      %s162 = smul.u32 4, %s14
      %p163 = scmp.lt.s32.totalorder %s162, 15
      %s164 = scalar_select %p163, %s162, 15
      %s165 = smul.addr %s164, 8
      %s166 = scalar_lea.vmem %s0, %s165
      %s167 = smul.u32 4, %s14
      %s168 = smul.u32 4, %s14
      %p169 = scmp.lt.s32.totalorder %s168, 15
      %s170 = scalar_select %p169, %s168, 15
      %s171 = smul.addr %s170, 8
      %s172 = scalar_lea.vmem %s3, %s171
      %s173 = smul.u32 4, %s14
      %v174 = vld [vmem:[%s166] sm:$0xff]
      %v175 = vld [vmem:[%s166 + $0x8] sm:$0xff]
      %v176 = vld [vmem:[%s166 + $0x10] sm:$0xff]
      %v177 = vld [vmem:[%s166 + $0x18] sm:$0xff]
      %v178 = vld [vmem:[%s1] sm:$0x1]
      %v180 = vperm.slane %v178, 0
      %v182 = vmul.f32 %v174, %v180
      %v183 = vmul.f32 %v175, %v180
      %v184 = vmul.f32 %v176, %v180
      %v185 = vmul.f32 %v177, %v180
      %v186 = vld [vmem:[%s2] sm:$0x1]
      %v188 = vperm.slane %v186, 0
      %v190 = vadd.f32 %v182, %v188
      %v191 = vadd.f32 %v183, %v188
      %v192 = vadd.f32 %v184, %v188
      %v193 = vadd.f32 %v185, %v188
      %vm194 = vcmask 130048
      %195 = vst.msk [vmem:[%s172] sm:$0xff] %vm194, %v190
      %196 = vst.msk [vmem:[%s172 + $0x8] sm:$0xff] %vm194, %v191
      %197 = vst.msk [vmem:[%s172 + $0x10] sm:$0xff] %vm194, %v192
      %198 = vst.msk [vmem:[%s172 + $0x18] sm:$0xff] %vm194, %v193
      %s199 = smul.u32 4, %s14
      %p200 = scmp.lt.s32.totalorder %s199, 15
      %s201 = scalar_select %p200, %s199, 15
      %s202 = smul.addr %s201, 8
      %s203 = scalar_lea.vmem %s3, %s202
      // Predicated region
      $region33: #{_lambda_.7} parent=31 // pred_check
        %p204 = pneg %p100
      $region34: #{_lambda_.7} parent=31 // pred_check_branch
        %206 = sbr.rel (%p204) target = $region36
      $region35: #{_lambda_.7} parent=31 // pred_region
        %s207 = smul.u32 4, %s14
      $region36: #{_lambda_.7} parent=31 // pred_fallthru
        _
    $region32: #{_lambda_.7} parent=5 // pred_fallthru
      _
    %p208 = scmp.le.s32.totalorder 2, %s9
    // Predicated region
    $region37: #{_lambda_.7} parent=5 // pred_check
      %p209 = pneg %p208
    $region38: #{_lambda_.7} parent=5 // pred_check_branch
      %211 = sbr.rel (%p209) target = $region40
    $region39: #{_lambda_.7} parent=5 // pred_region
      %s212 = ssub.s32 %s9, 2
      // Predicated region
      $region41: #{_lambda_.7} parent=39 // pred_check
        %p213 = pneg %p106
      $region42: #{_lambda_.7} parent=39 // pred_check_branch
        %215 = sbr.rel (%p213) target = $region44
      $region43: #{_lambda_.7} parent=39 // pred_region
        %s216 = smul.u32 4, %s15
        %p217 = scmp.lt.s32.totalorder %s216, 15
        %s218 = scalar_select %p217, %s216, 15
        %s219 = smul.addr %s218, 8
        %s220 = scalar_lea.vmem %s3, %s219
      $region44: #{_lambda_.7} parent=39 // pred_fallthru
        _
    $region40: #{_lambda_.7} parent=5 // pred_fallthru
      _
  $region6: #{_lambda_.7} parent=0 // loop_footer
    %s13 = sadd.s32 1, %s9
  $region7: #{_lambda_.7} parent=0 // loop_footer_branch
    %8 = sbr.rel target = $region3
  $region8: #{_lambda_.7} parent=0 // loop_exit
    _

// kernel: _lambda_.4
$region0: #{_lambda_.4}
  #allocation0 [shape = 'u32[]', space=smem, size = 0x4, offset = 0x4, fixed_abs, tag = 'smem constant byte address 0x4 - core index']
  #allocation1 [shape = 'u32[72,128]{1,0:T(1,128)}', space=vmem, size = 0x9000, scoped, tag = 'internal scratch']
  %s0 = inlined_call_operand.vmem [shape: f32[128,16], index: 0, kind: input, shape index: {}]
  %s1 = inlined_call_operand.vmem [shape: f32[16,128], index: 1, kind: input, shape index: {}]
  %s2 = inlined_call_operand.vmem [shape: f32[1,128], index: 2, kind: input, shape index: {}]
  %s3 = inlined_call_operand.vmem [shape: f32[128,128], index: 3, kind: output, shape index: {0}]
  %s4 = inlined_call_operand.vmem [shape: f32[4,2,128], index: 4, kind: output, shape index: {1}]
  %5 = xla_tuple %s3, %s4
  %s6 = sld [smem:[#allocation0]]
  $region53: #{_lambda_.4} parent=0
    _
  %s8 = ssub.s32 1, %s6
  %s9 = scalar_select 0, %s8, %s6
  loop: start=0, step=1, limit=6
  $region2: #{_lambda_.4} parent=0 // loop_pre_header
    _
  $region3: #{_lambda_.4} parent=0 // loop_header
    %s11 = sphi 0, %s15
    %p12 = scmp.ge.s32.totalorder %s11, 6
    %s21 = sphi 0, %s23
    %s24 = sphi 0, %s21
    %s25 = sphi 0, %s24
    %s41 = sphi 0, %s25
    %s45 = sphi 0, %s45
    %s47 = sphi 0, %s45
    %s48 = sphi 0, %s47
    %s62 = sphi 0, %s48
    %s66 = sphi 0, %s66
    %s68 = sphi 0, %s66
    %s69 = sphi 0, %s68
    %s83 = sphi 0, %s69
    %s89 = sphi 0, %s91
    %s92 = sphi 0, %s89
    %s93 = sphi 0, %s92
    %s109 = sphi 0, %s93
    %s115 = sphi 0, %s117
    %s118 = sphi 0, %s115
    %s119 = sphi 0, %s118
    %s135 = sphi 0, %s119
  $region4: #{_lambda_.4} parent=0 // loop_header_branch
    %14 = sbr.rel (%p12) target = $region8
  $region5: #{_lambda_.4} parent=0 // loop_body
    %s16 = ssub.s32 %s11, 1
    %s17 = ssub.s32 %s11, 2
    %s18 = sadd.s32 %s11, 1
    %s19 = ssub.s32 %s11, %s18
    %p20 = scmp.eq.s32.totalorder %s19, 0
    %s22 = sadd.s32 %s21, 1
    %s23 = scalar_select %p20, %s21, %s22
    %p26 = pneg %p20
    %p27 = scmp.eq.s32.totalorder %s11, 3
    %p28 = por %p26, %p27
    %p29 = scmp.ne.s32.totalorder %s21, %s24
    %p30 = scmp.eq.s32.totalorder %s11, 0
    %p31 = por %p29, %p30
    %p32 = scmp.ne.s32.totalorder %s21, %s24
    %p33 = scmp.eq.s32.totalorder %s16, 3
    %p34 = por %p32, %p33
    %p35 = scmp.ne.s32.totalorder %s24, %s25
    %p36 = scmp.eq.s32.totalorder %s16, 0
    %p37 = por %p35, %p36
    %p38 = scmp.ne.s32.totalorder %s24, %s25
    %p39 = scmp.eq.s32.totalorder %s17, 3
    %p40 = por %p38, %p39
    %p42 = scmp.ne.s32.totalorder %s25, %s41
    %p43 = scmp.eq.s32.totalorder %s17, 0
    %p44 = por %p42, %p43
    %s46 = sadd.s32 %s45, 1
    %p49 = scmp.eq.s32.totalorder %s11, 3
    %p50 = scmp.ne.s32.totalorder %s45, %s47
    %p51 = scmp.eq.s32.totalorder %s11, 0
    %p52 = por %p50, %p51
    %p53 = scmp.ne.s32.totalorder %s45, %s47
    %p54 = scmp.eq.s32.totalorder %s16, 3
    %p55 = por %p53, %p54
    %p56 = scmp.ne.s32.totalorder %s47, %s48
    %p57 = scmp.eq.s32.totalorder %s16, 0
    %p58 = por %p56, %p57
    %p59 = scmp.ne.s32.totalorder %s47, %s48
    %p60 = scmp.eq.s32.totalorder %s17, 3
    %p61 = por %p59, %p60
    %p63 = scmp.ne.s32.totalorder %s48, %s62
    %p64 = scmp.eq.s32.totalorder %s17, 0
    %p65 = por %p63, %p64
    %s67 = sadd.s32 %s66, 1
    %p70 = scmp.eq.s32.totalorder %s11, 3
    %p71 = scmp.ne.s32.totalorder %s66, %s68
    %p72 = scmp.eq.s32.totalorder %s11, 0
    %p73 = por %p71, %p72
    %p74 = scmp.ne.s32.totalorder %s66, %s68
    %p75 = scmp.eq.s32.totalorder %s16, 3
    %p76 = por %p74, %p75
    %p77 = scmp.ne.s32.totalorder %s68, %s69
    %p78 = scmp.eq.s32.totalorder %s16, 0
    %p79 = por %p77, %p78
    %p80 = scmp.ne.s32.totalorder %s68, %s69
    %p81 = scmp.eq.s32.totalorder %s17, 3
    %p82 = por %p80, %p81
    %p84 = scmp.ne.s32.totalorder %s69, %s83
    %p85 = scmp.eq.s32.totalorder %s17, 0
    %p86 = por %p84, %p85
    %s87 = ssub.s32 %s11, %s18
    %p88 = scmp.eq.s32.totalorder %s87, 0
    %s90 = sadd.s32 %s89, 1
    %s91 = scalar_select %p88, %s89, %s90
    %p94 = pneg %p88
    %p95 = scmp.eq.s32.totalorder %s11, 3
    %p96 = por %p94, %p95
    %p97 = scmp.ne.s32.totalorder %s89, %s92
    %p98 = scmp.eq.s32.totalorder %s11, 0
    %p99 = por %p97, %p98
    %p100 = scmp.ne.s32.totalorder %s89, %s92
    %p101 = scmp.eq.s32.totalorder %s16, 3
    %p102 = por %p100, %p101
    %p103 = scmp.ne.s32.totalorder %s92, %s93
    %p104 = scmp.eq.s32.totalorder %s16, 0
    %p105 = por %p103, %p104
    %p106 = scmp.ne.s32.totalorder %s92, %s93
    %p107 = scmp.eq.s32.totalorder %s17, 3
    %p108 = por %p106, %p107
    %p110 = scmp.ne.s32.totalorder %s93, %s109
    %p111 = scmp.eq.s32.totalorder %s17, 0
    %p112 = por %p110, %p111
    %s113 = ssub.s32 %s11, %s18
    %p114 = scmp.eq.s32.totalorder %s113, 0
    %s116 = sadd.s32 %s115, 1
    %s117 = scalar_select %p114, %s115, %s116
    %p120 = pneg %p114
    %p121 = scmp.eq.s32.totalorder %s11, 3
    %p122 = por %p120, %p121
    %p123 = scmp.ne.s32.totalorder %s115, %s118
    %p124 = scmp.eq.s32.totalorder %s11, 0
    %p125 = por %p123, %p124
    %p126 = scmp.ne.s32.totalorder %s115, %s118
    %p127 = scmp.eq.s32.totalorder %s16, 3
    %p128 = por %p126, %p127
    %p129 = scmp.ne.s32.totalorder %s118, %s119
    %p130 = scmp.eq.s32.totalorder %s16, 0
    %p131 = por %p129, %p130
    %p132 = scmp.ne.s32.totalorder %s118, %s119
    %p133 = scmp.eq.s32.totalorder %s17, 3
    %p134 = por %p132, %p133
    %p136 = scmp.ne.s32.totalorder %s119, %s135
    %p137 = scmp.eq.s32.totalorder %s17, 0
    %p138 = por %p136, %p137
    %p139 = scmp.le.s32.totalorder 1, %s11
    %p140 = scmp.lt.s32.totalorder %s11, 5
    %p141 = pnand %p139, %p140
    %p142 = pneg %p141
    // Predicated region
    $region9: #{_lambda_.4} parent=5 // pred_check
      _
    $region10: #{_lambda_.4} parent=5 // pred_check_branch
      %144 = sbr.rel (%p141) target = $region12
    $region11: #{_lambda_.4} parent=5 // pred_region
      %s145 = ssub.s32 %s11, 1
      // Predicated region
      $region13: #{_lambda_.4} parent=11 // pred_check
        %p146 = pneg %p58
      $region14: #{_lambda_.4} parent=11 // pred_check_branch
        %148 = sbr.rel (%p146) target = $region16
      $region15: #{_lambda_.4} parent=11 // pred_region
        _
      $region16: #{_lambda_.4} parent=11 // pred_fallthru
        _
      // Predicated region
      $region17: #{_lambda_.4} parent=11 // pred_check
        %p149 = pneg %p79
      $region18: #{_lambda_.4} parent=11 // pred_check_branch
        %151 = sbr.rel (%p149) target = $region20
      $region19: #{_lambda_.4} parent=11 // pred_region
        _
      $region20: #{_lambda_.4} parent=11 // pred_fallthru
        _
    $region12: #{_lambda_.4} parent=5 // pred_fallthru
      _
    %p152 = scmp.lt.s32.totalorder %s11, 4
    // Predicated region
    $region21: #{_lambda_.4} parent=5 // pred_check
      %p153 = pneg %p152
    $region22: #{_lambda_.4} parent=5 // pred_check_branch
      %155 = sbr.rel (%p153) target = $region24
    $region23: #{_lambda_.4} parent=5 // pred_region
      // Predicated region
      $region25: #{_lambda_.4} parent=23 // pred_check
        %p156 = pneg %p31
      $region26: #{_lambda_.4} parent=23 // pred_check_branch
        %158 = sbr.rel (%p156) target = $region28
      $region27: #{_lambda_.4} parent=23 // pred_region
        %s159 = smul.u32 4, %s11
        %p160 = scmp.lt.s32.totalorder %s159, 15
        %s161 = scalar_select %p160, %s159, 15
        %s162 = smul.addr %s161, 8
        %s163 = scalar_lea.vmem %s0, %s162
        %s164 = smul.u32 4, %s11
      $region28: #{_lambda_.4} parent=23 // pred_fallthru
        _
    $region24: #{_lambda_.4} parent=5 // pred_fallthru
      _
    %p165 = scmp.le.s32.totalorder 1, %s11
    %p166 = scmp.lt.s32.totalorder %s11, 5
    %p167 = pnand %p165, %p166
    %p168 = pneg %p167
    // Predicated region
    $region29: #{_lambda_.4} parent=5 // pred_check
      _
    $region30: #{_lambda_.4} parent=5 // pred_check_branch
      %170 = sbr.rel (%p167) target = $region32
    $region31: #{_lambda_.4} parent=5 // pred_region
      %s171 = ssub.s32 %s11, 1
      %s172 = smul.u32 4, %s16
      %p173 = scmp.lt.s32.totalorder %s172, 15
      %s174 = scalar_select %p173, %s172, 15
      %s175 = smul.addr %s174, 8
      %s176 = scalar_lea.vmem %s0, %s175
      %p177 = pneg %p37
      %p178 = pneg %p34
      %p179 = pneg %p58
      %p180 = pneg %p55
      %p181 = pneg %p79
      %p182 = pneg %p76
      %p183 = pneg %p105
      %p184 = pneg %p102
      %s185 = smul.u32 4, %s16
      %p186 = scmp.lt.s32.totalorder %s185, 15
      %s187 = scalar_select %p186, %s185, 15
      %s188 = smul.addr %s187, 8
      %s189 = scalar_lea.vmem %s3, %s188
      %p190 = pneg %p131
      %p191 = pneg %p128
      %p192 = scmp.lt.s32.totalorder %s16, 3
      %s193 = scalar_select %p192, %s16, 3
      %s194 = smul.addr %s193, 2
      %s195 = scalar_lea.vmem %s4, %s194
      %s196 = smul.u32 4, %s16
      %p197 = scmp.lt.s32.totalorder %s196, 15
      %s198 = scalar_select %p197, %s196, 15
      %s199 = smul.addr %s198, 8
      %s200 = scalar_lea.vmem %s0, %s199
      %s201 = smul.u32 4, %s16
      %s202 = smul.u32 4, %s16
      %p203 = scmp.lt.s32.totalorder %s202, 15
      %s204 = scalar_select %p203, %s202, 15
      %s205 = smul.addr %s204, 8
      %s206 = scalar_lea.vmem %s3, %s205
      %s207 = smul.u32 4, %s16
      %p208 = scmp.lt.s32.totalorder %s16, 3
      %s209 = scalar_select %p208, %s16, 3
      %s210 = smul.addr %s209, 2
      %s211 = scalar_lea.vmem %s4, %s210
      %v212 = vld [vmem:[%s200] sm:$0xff]
      %v213 = vld [vmem:[%s200 + $0x8] sm:$0xff]
      %v214 = vld [vmem:[%s200 + $0x10] sm:$0xff]
      %v215 = vld [vmem:[%s200 + $0x18] sm:$0xff]
      %v216 = vld [vmem:[%s1] sm:$0xff]
      %v217 = vld [vmem:[%s1 + $0x8] sm:$0xff]
      %v218 = vld [vmem:[%s2] sm:$0x1]
      %v220 = vperm.slane %v218, 0
      %vm222 = vcmask 130048
      %v224 = vsel %vm222, %v212, 0
      %v227 = vsel %vm222, %v213, 0
      %v230 = vsel %vm222, %v214, 0
      %v233 = vsel %vm222, %v215, 0
      %235 = vmatpush.msra.mxu0 0.0
      %236 = vmatpush.msra.mxu0 0.0
      %237 = vmatpush.msra.mxu0 0.0
      %238 = vmatpush.msra.mxu0 0.0
      %239 = vmatpush.msra.mxu0 0.0
      %240 = vmatpush.msra.mxu0 0.0
      %241 = vmatpush.msra.mxu0 0.0
      %242 = vmatpush.msra.mxu0 0.0
      %243 = vmatpush.msra.mxu0 0.0
      %244 = vmatpush.msra.mxu0 0.0
      %245 = vmatpush.msra.mxu0 0.0
      %246 = vmatpush.msra.mxu0 0.0
      %247 = vmatpush.msra.mxu0 0.0
      %248 = vmatpush.msra.mxu0 0.0
      %249 = vmatpush.msra.mxu0 %v217
      %250 = vmatpush.msra.mxu0 %v216
      %251 = vmatmul.f32.gmra.mxu0 %v224
      %v252 = vpop.f32.mrf.mxu0
      %v253 = vadd.f32 %v220, %v252
      %254 = vmatmul.f32.gmra.mxu0 %v227
      %v255 = vpop.f32.mrf.mxu0
      %v256 = vadd.f32 %v220, %v255
      %257 = vmatmul.f32.gmra.mxu0 %v230
      %v258 = vpop.f32.mrf.mxu0
      %v259 = vadd.f32 %v220, %v258
      %260 = vmatmul.f32.gmra.mxu0 %v233
      %v261 = vpop.f32.mrf.mxu0
      %v262 = vadd.f32 %v220, %v261
      %263 = vdwg.mxu0
      %vm264 = vcmp.lt.f32.partialorder %v253, 1.0
      %vm265 = vcmp.lt.f32.partialorder %v256, 1.0
      %vm266 = vcmp.lt.f32.partialorder %v259, 1.0
      %vm267 = vcmp.lt.f32.partialorder %v262, 1.0
      %vm268 = vcmp.gt.f32.partialorder %v253, -3.0
      %vm269 = vcmp.gt.f32.partialorder %v256, -3.0
      %vm270 = vcmp.gt.f32.partialorder %v259, -3.0
      %vm271 = vcmp.gt.f32.partialorder %v262, -3.0
      %vm272 = vcmp.le.f32.partialorder %v253, -1.0
      %vm273 = vcmp.le.f32.partialorder %v256, -1.0
      %vm274 = vcmp.le.f32.partialorder %v259, -1.0
      %vm275 = vcmp.le.f32.partialorder %v262, -1.0
      %vm276 = vmand %vm268, %vm272
      %vm277 = vmand %vm269, %vm273
      %vm278 = vmand %vm270, %vm274
      %vm279 = vmand %vm271, %vm275
      %v280 = vadd.f32 %v253, 3.0
      %v281 = vadd.f32 %v256, 3.0
      %v282 = vadd.f32 %v259, 3.0
      %v283 = vadd.f32 %v262, 3.0
      %v284 = vmul.f32 %v280, -0.07728577
      %v285 = vmul.f32 %v281, -0.07728577
      %v286 = vmul.f32 %v282, -0.07728577
      %v287 = vmul.f32 %v283, -0.07728577
      %v288 = vsub.f32 %v284, 0.0039978027
      %v289 = vsub.f32 %v285, 0.0039978027
      %v290 = vsub.f32 %v286, 0.0039978027
      %v291 = vsub.f32 %v287, 0.0039978027
      %v292 = vsel %vm276, %v288, 0.0
      %v293 = vsel %vm277, %v289, 0.0
      %v294 = vsel %vm278, %v290, 0.0
      %v295 = vsel %vm279, %v291, 0.0
      %vm296 = vcmp.lt.f32.partialorder %v253, 0.0
      %vm297 = vcmp.lt.f32.partialorder %v256, 0.0
      %vm298 = vcmp.lt.f32.partialorder %v259, 0.0
      %vm299 = vcmp.lt.f32.partialorder %v262, 0.0
      %v300 = vsel %vm296, 0.1586914, 0.8412781
      %v301 = vsel %vm297, 0.1586914, 0.8412781
      %v302 = vsel %vm298, 0.1586914, 0.8412781
      %v303 = vsel %vm299, 0.1586914, 0.8412781
      %vm304 = vcmp.ge.f32.partialorder %v253, -1.0
      %vm305 = vcmp.ge.f32.partialorder %v256, -1.0
      %vm306 = vcmp.ge.f32.partialorder %v259, -1.0
      %vm307 = vcmp.ge.f32.partialorder %v262, -1.0
      %vm308 = vmand %vm304, %vm264
      %vm309 = vmand %vm305, %vm265
      %vm310 = vmand %vm306, %vm266
      %vm311 = vmand %vm307, %vm267
      %v312 = vmul.f32 %v300, %v253
      %v313 = vmul.f32 %v301, %v256
      %v314 = vmul.f32 %v302, %v259
      %v315 = vmul.f32 %v303, %v262
      %v316 = vsel %vm308, %v312, 0.0
      %v317 = vsel %vm309, %v313, 0.0
      %v318 = vsel %vm310, %v314, 0.0
      %v319 = vsel %vm311, %v315, 0.0
      %vm320 = vcmp.lt.f32.partialorder %v253, 3.0
      %vm321 = vcmp.lt.f32.partialorder %v256, 3.0
      %vm322 = vcmp.lt.f32.partialorder %v259, 3.0
      %vm323 = vcmp.lt.f32.partialorder %v262, 3.0
      %v324 = vsub.f32 %v253, 1.0
      %v325 = vsub.f32 %v256, 1.0
      %v326 = vsub.f32 %v259, 1.0
      %v327 = vsub.f32 %v262, 1.0
      %v328 = vmul.f32 %v324, 1.0772858
      %v329 = vmul.f32 %v325, 1.0772858
      %v330 = vmul.f32 %v326, 1.0772858
      %v331 = vmul.f32 %v327, 1.0772858
      %v332 = vadd.f32 %v328, 0.8412781
      %v333 = vadd.f32 %v329, 0.8412781
      %v334 = vadd.f32 %v330, 0.8412781
      %v335 = vadd.f32 %v331, 0.8412781
      %v336 = vsel %vm320, %v332, %v253
      %v337 = vsel %vm321, %v333, %v256
      %v338 = vsel %vm322, %v334, %v259
      %v339 = vsel %vm323, %v335, %v262
      %v340 = vsel %vm264, 0.0, %v336
      %v341 = vsel %vm265, 0.0, %v337
      %v342 = vsel %vm266, 0.0, %v338
      %v343 = vsel %vm267, 0.0, %v339
      %v344 = vadd.f32 %v292, %v316
      %v345 = vadd.f32 %v293, %v317
      %v346 = vadd.f32 %v294, %v318
      %v347 = vadd.f32 %v295, %v319
      %v348 = vadd.f32 %v344, %v340
      %v349 = vadd.f32 %v345, %v341
      %v350 = vadd.f32 %v346, %v342
      %v351 = vadd.f32 %v347, %v343
      %352 = vst [vmem:[%s206] sm:$0xff] %v348
      %353 = vst [vmem:[%s206 + $0x8] sm:$0xff] %v349
      %354 = vst [vmem:[%s206 + $0x10] sm:$0xff] %v350
      %355 = vst [vmem:[%s206 + $0x18] sm:$0xff] %v351
      %v356 = vadd.f32 %v348, %v349
      %v357 = vadd.f32 %v356, %v350
      %v358 = vadd.f32 %v357, %v351
      %v359 = vrot.slane %v358, 4
      %v360 = vadd.f32 %v358, %v359
      %v361 = vrot.slane %v360, 2
      %v362 = vadd.f32 %v360, %v361
      %v363 = vrot.slane %v362, 1
      %v364 = vadd.f32 %v362, %v363
      %v365 = vmul.f32 %v348, %v348
      %v366 = vmul.f32 %v349, %v349
      %v367 = vmul.f32 %v350, %v350
      %v368 = vmul.f32 %v351, %v351
      %v369 = vadd.f32 %v365, %v366
      %v370 = vadd.f32 %v369, %v367
      %v371 = vadd.f32 %v370, %v368
      %v372 = vrot.slane %v371, 4
      %v373 = vadd.f32 %v371, %v372
      %v374 = vrot.slane %v373, 2
      %v375 = vadd.f32 %v373, %v374
      %v376 = vrot.slane %v375, 1
      %v377 = vadd.f32 %v375, %v376
      %vm378 = vcmask 1040384
      %v379 = vsel %vm378, %v364, %v377
      %380 = vst [vmem:[%s211] sm:$0x3] %v379
      %s381 = smul.u32 4, %s16
      %p382 = scmp.lt.s32.totalorder %s381, 15
      %s383 = scalar_select %p382, %s381, 15
      %s384 = smul.addr %s383, 8
      %s385 = scalar_lea.vmem %s3, %s384
      %p386 = scmp.lt.s32.totalorder %s16, 3
      %s387 = scalar_select %p386, %s16, 3
      %s388 = smul.addr %s387, 2
      %s389 = scalar_lea.vmem %s4, %s388
      // Predicated region
      $region33: #{_lambda_.4} parent=31 // pred_check
        %p390 = pneg %p102
      $region34: #{_lambda_.4} parent=31 // pred_check_branch
        %392 = sbr.rel (%p390) target = $region36
      $region35: #{_lambda_.4} parent=31 // pred_region
        %s393 = smul.u32 4, %s16
      $region36: #{_lambda_.4} parent=31 // pred_fallthru
        _
      // Predicated region
      $region37: #{_lambda_.4} parent=31 // pred_check
        %p394 = pneg %p128
      $region38: #{_lambda_.4} parent=31 // pred_check_branch
        %396 = sbr.rel (%p394) target = $region40
      $region39: #{_lambda_.4} parent=31 // pred_region
        _
      $region40: #{_lambda_.4} parent=31 // pred_fallthru
        _
    $region32: #{_lambda_.4} parent=5 // pred_fallthru
      _
    %p397 = scmp.le.s32.totalorder 2, %s11
    // Predicated region
    $region41: #{_lambda_.4} parent=5 // pred_check
      %p398 = pneg %p397
    $region42: #{_lambda_.4} parent=5 // pred_check_branch
      %400 = sbr.rel (%p398) target = $region44
    $region43: #{_lambda_.4} parent=5 // pred_region
      %s401 = ssub.s32 %s11, 2
      // Predicated region
      $region45: #{_lambda_.4} parent=43 // pred_check
        %p402 = pneg %p108
      $region46: #{_lambda_.4} parent=43 // pred_check_branch
        %404 = sbr.rel (%p402) target = $region48
      $region47: #{_lambda_.4} parent=43 // pred_region
        %s405 = smul.u32 4, %s17
        %p406 = scmp.lt.s32.totalorder %s405, 15
        %s407 = scalar_select %p406, %s405, 15
        %s408 = smul.addr %s407, 8
        %s409 = scalar_lea.vmem %s3, %s408
      $region48: #{_lambda_.4} parent=43 // pred_fallthru
        _
      // Predicated region
      $region49: #{_lambda_.4} parent=43 // pred_check
        %p410 = pneg %p134
      $region50: #{_lambda_.4} parent=43 // pred_check_branch
        %412 = sbr.rel (%p410) target = $region52
      $region51: #{_lambda_.4} parent=43 // pred_region
        %p413 = scmp.lt.s32.totalorder %s17, 3
        %s414 = scalar_select %p413, %s17, 3
        %s415 = smul.addr %s414, 2
        %s416 = scalar_lea.vmem %s4, %s415
      $region52: #{_lambda_.4} parent=43 // pred_fallthru
        _
    $region44: #{_lambda_.4} parent=5 // pred_fallthru
      _
  $region6: #{_lambda_.4} parent=0 // loop_footer
    %s15 = sadd.s32 1, %s11
  $region7: #{_lambda_.4} parent=0 // loop_footer_branch
    %10 = sbr.rel target = $region3
  $region8: #{_lambda_.4} parent=0 // loop_exit
    _

// kernel: _lambda_.6
$region0: #{_lambda_.6}
  #allocation0 [shape = 'u32[]', space=smem, size = 0x4, offset = 0x4, fixed_abs, tag = 'smem constant byte address 0x4 - core index']
  #allocation1 [shape = 'u32[72,128]{1,0:T(1,128)}', space=vmem, size = 0x9000, scoped, tag = 'internal scratch']
  %s0 = inlined_call_operand.vmem [shape: f32[128,128], index: 0, kind: input, shape index: {}]
  %s1 = inlined_call_operand.vmem [shape: f32[128,128], index: 1, kind: input, shape index: {}]
  %s2 = inlined_call_operand.vmem [shape: f32[1,128], index: 2, kind: input, shape index: {}]
  %s3 = inlined_call_operand.vmem [shape: f32[128,128], index: 3, kind: output, shape index: {0}]
  %s4 = inlined_call_operand.vmem [shape: f32[4,2,128], index: 4, kind: output, shape index: {1}]
  %5 = xla_tuple %s3, %s4
  %s6 = sld [smem:[#allocation0]]
  $region53: #{_lambda_.6} parent=0
    _
  %s8 = ssub.s32 1, %s6
  %s9 = scalar_select 0, %s8, %s6
  loop: start=0, step=1, limit=6
  $region2: #{_lambda_.6} parent=0 // loop_pre_header
    _
  $region3: #{_lambda_.6} parent=0 // loop_header
    %s11 = sphi 0, %s15
    %p12 = scmp.ge.s32.totalorder %s11, 6
    %s21 = sphi 0, %s23
    %s24 = sphi 0, %s21
    %s25 = sphi 0, %s24
    %s41 = sphi 0, %s25
    %s45 = sphi 0, %s45
    %s47 = sphi 0, %s45
    %s48 = sphi 0, %s47
    %s62 = sphi 0, %s48
    %s66 = sphi 0, %s66
    %s68 = sphi 0, %s66
    %s69 = sphi 0, %s68
    %s83 = sphi 0, %s69
    %s89 = sphi 0, %s91
    %s92 = sphi 0, %s89
    %s93 = sphi 0, %s92
    %s109 = sphi 0, %s93
    %s115 = sphi 0, %s117
    %s118 = sphi 0, %s115
    %s119 = sphi 0, %s118
    %s135 = sphi 0, %s119
  $region4: #{_lambda_.6} parent=0 // loop_header_branch
    %14 = sbr.rel (%p12) target = $region8
  $region5: #{_lambda_.6} parent=0 // loop_body
    %s16 = ssub.s32 %s11, 1
    %s17 = ssub.s32 %s11, 2
    %s18 = sadd.s32 %s11, 1
    %s19 = ssub.s32 %s11, %s18
    %p20 = scmp.eq.s32.totalorder %s19, 0
    %s22 = sadd.s32 %s21, 1
    %s23 = scalar_select %p20, %s21, %s22
    %p26 = pneg %p20
    %p27 = scmp.eq.s32.totalorder %s11, 3
    %p28 = por %p26, %p27
    %p29 = scmp.ne.s32.totalorder %s21, %s24
    %p30 = scmp.eq.s32.totalorder %s11, 0
    %p31 = por %p29, %p30
    %p32 = scmp.ne.s32.totalorder %s21, %s24
    %p33 = scmp.eq.s32.totalorder %s16, 3
    %p34 = por %p32, %p33
    %p35 = scmp.ne.s32.totalorder %s24, %s25
    %p36 = scmp.eq.s32.totalorder %s16, 0
    %p37 = por %p35, %p36
    %p38 = scmp.ne.s32.totalorder %s24, %s25
    %p39 = scmp.eq.s32.totalorder %s17, 3
    %p40 = por %p38, %p39
    %p42 = scmp.ne.s32.totalorder %s25, %s41
    %p43 = scmp.eq.s32.totalorder %s17, 0
    %p44 = por %p42, %p43
    %s46 = sadd.s32 %s45, 1
    %p49 = scmp.eq.s32.totalorder %s11, 3
    %p50 = scmp.ne.s32.totalorder %s45, %s47
    %p51 = scmp.eq.s32.totalorder %s11, 0
    %p52 = por %p50, %p51
    %p53 = scmp.ne.s32.totalorder %s45, %s47
    %p54 = scmp.eq.s32.totalorder %s16, 3
    %p55 = por %p53, %p54
    %p56 = scmp.ne.s32.totalorder %s47, %s48
    %p57 = scmp.eq.s32.totalorder %s16, 0
    %p58 = por %p56, %p57
    %p59 = scmp.ne.s32.totalorder %s47, %s48
    %p60 = scmp.eq.s32.totalorder %s17, 3
    %p61 = por %p59, %p60
    %p63 = scmp.ne.s32.totalorder %s48, %s62
    %p64 = scmp.eq.s32.totalorder %s17, 0
    %p65 = por %p63, %p64
    %s67 = sadd.s32 %s66, 1
    %p70 = scmp.eq.s32.totalorder %s11, 3
    %p71 = scmp.ne.s32.totalorder %s66, %s68
    %p72 = scmp.eq.s32.totalorder %s11, 0
    %p73 = por %p71, %p72
    %p74 = scmp.ne.s32.totalorder %s66, %s68
    %p75 = scmp.eq.s32.totalorder %s16, 3
    %p76 = por %p74, %p75
    %p77 = scmp.ne.s32.totalorder %s68, %s69
    %p78 = scmp.eq.s32.totalorder %s16, 0
    %p79 = por %p77, %p78
    %p80 = scmp.ne.s32.totalorder %s68, %s69
    %p81 = scmp.eq.s32.totalorder %s17, 3
    %p82 = por %p80, %p81
    %p84 = scmp.ne.s32.totalorder %s69, %s83
    %p85 = scmp.eq.s32.totalorder %s17, 0
    %p86 = por %p84, %p85
    %s87 = ssub.s32 %s11, %s18
    %p88 = scmp.eq.s32.totalorder %s87, 0
    %s90 = sadd.s32 %s89, 1
    %s91 = scalar_select %p88, %s89, %s90
    %p94 = pneg %p88
    %p95 = scmp.eq.s32.totalorder %s11, 3
    %p96 = por %p94, %p95
    %p97 = scmp.ne.s32.totalorder %s89, %s92
    %p98 = scmp.eq.s32.totalorder %s11, 0
    %p99 = por %p97, %p98
    %p100 = scmp.ne.s32.totalorder %s89, %s92
    %p101 = scmp.eq.s32.totalorder %s16, 3
    %p102 = por %p100, %p101
    %p103 = scmp.ne.s32.totalorder %s92, %s93
    %p104 = scmp.eq.s32.totalorder %s16, 0
    %p105 = por %p103, %p104
    %p106 = scmp.ne.s32.totalorder %s92, %s93
    %p107 = scmp.eq.s32.totalorder %s17, 3
    %p108 = por %p106, %p107
    %p110 = scmp.ne.s32.totalorder %s93, %s109
    %p111 = scmp.eq.s32.totalorder %s17, 0
    %p112 = por %p110, %p111
    %s113 = ssub.s32 %s11, %s18
    %p114 = scmp.eq.s32.totalorder %s113, 0
    %s116 = sadd.s32 %s115, 1
    %s117 = scalar_select %p114, %s115, %s116
    %p120 = pneg %p114
    %p121 = scmp.eq.s32.totalorder %s11, 3
    %p122 = por %p120, %p121
    %p123 = scmp.ne.s32.totalorder %s115, %s118
    %p124 = scmp.eq.s32.totalorder %s11, 0
    %p125 = por %p123, %p124
    %p126 = scmp.ne.s32.totalorder %s115, %s118
    %p127 = scmp.eq.s32.totalorder %s16, 3
    %p128 = por %p126, %p127
    %p129 = scmp.ne.s32.totalorder %s118, %s119
    %p130 = scmp.eq.s32.totalorder %s16, 0
    %p131 = por %p129, %p130
    %p132 = scmp.ne.s32.totalorder %s118, %s119
    %p133 = scmp.eq.s32.totalorder %s17, 3
    %p134 = por %p132, %p133
    %p136 = scmp.ne.s32.totalorder %s119, %s135
    %p137 = scmp.eq.s32.totalorder %s17, 0
    %p138 = por %p136, %p137
    %p139 = scmp.le.s32.totalorder 1, %s11
    %p140 = scmp.lt.s32.totalorder %s11, 5
    %p141 = pnand %p139, %p140
    %p142 = pneg %p141
    // Predicated region
    $region9: #{_lambda_.6} parent=5 // pred_check
      _
    $region10: #{_lambda_.6} parent=5 // pred_check_branch
      %144 = sbr.rel (%p141) target = $region12
    $region11: #{_lambda_.6} parent=5 // pred_region
      %s145 = ssub.s32 %s11, 1
      // Predicated region
      $region13: #{_lambda_.6} parent=11 // pred_check
        %p146 = pneg %p58
      $region14: #{_lambda_.6} parent=11 // pred_check_branch
        %148 = sbr.rel (%p146) target = $region16
      $region15: #{_lambda_.6} parent=11 // pred_region
        _
      $region16: #{_lambda_.6} parent=11 // pred_fallthru
        _
      // Predicated region
      $region17: #{_lambda_.6} parent=11 // pred_check
        %p149 = pneg %p79
      $region18: #{_lambda_.6} parent=11 // pred_check_branch
        %151 = sbr.rel (%p149) target = $region20
      $region19: #{_lambda_.6} parent=11 // pred_region
        _
      $region20: #{_lambda_.6} parent=11 // pred_fallthru
        _
    $region12: #{_lambda_.6} parent=5 // pred_fallthru
      _
    %p152 = scmp.lt.s32.totalorder %s11, 4
    // Predicated region
    $region21: #{_lambda_.6} parent=5 // pred_check
      %p153 = pneg %p152
    $region22: #{_lambda_.6} parent=5 // pred_check_branch
      %155 = sbr.rel (%p153) target = $region24
    $region23: #{_lambda_.6} parent=5 // pred_region
      // Predicated region
      $region25: #{_lambda_.6} parent=23 // pred_check
        %p156 = pneg %p31
      $region26: #{_lambda_.6} parent=23 // pred_check_branch
        %158 = sbr.rel (%p156) target = $region28
      $region27: #{_lambda_.6} parent=23 // pred_region
        %s159 = smul.u32 4, %s11
        %p160 = scmp.lt.s32.totalorder %s159, 15
        %s161 = scalar_select %p160, %s159, 15
        %s162 = smul.addr %s161, 8
        %s163 = scalar_lea.vmem %s0, %s162
        %s164 = smul.u32 4, %s11
      $region28: #{_lambda_.6} parent=23 // pred_fallthru
        _
    $region24: #{_lambda_.6} parent=5 // pred_fallthru
      _
    %p165 = scmp.le.s32.totalorder 1, %s11
    %p166 = scmp.lt.s32.totalorder %s11, 5
    %p167 = pnand %p165, %p166
    %p168 = pneg %p167
    // Predicated region
    $region29: #{_lambda_.6} parent=5 // pred_check
      _
    $region30: #{_lambda_.6} parent=5 // pred_check_branch
      %170 = sbr.rel (%p167) target = $region32
    $region31: #{_lambda_.6} parent=5 // pred_region
      %s171 = ssub.s32 %s11, 1
      %s172 = smul.u32 4, %s16
      %p173 = scmp.lt.s32.totalorder %s172, 15
      %s174 = scalar_select %p173, %s172, 15
      %s175 = smul.addr %s174, 8
      %s176 = scalar_lea.vmem %s0, %s175
      %p177 = pneg %p37
      %p178 = pneg %p34
      %p179 = pneg %p58
      %p180 = pneg %p55
      %p181 = pneg %p79
      %p182 = pneg %p76
      %p183 = pneg %p105
      %p184 = pneg %p102
      %s185 = smul.u32 4, %s16
      %p186 = scmp.lt.s32.totalorder %s185, 15
      %s187 = scalar_select %p186, %s185, 15
      %s188 = smul.addr %s187, 8
      %s189 = scalar_lea.vmem %s3, %s188
      %p190 = pneg %p131
      %p191 = pneg %p128
      %p192 = scmp.lt.s32.totalorder %s16, 3
      %s193 = scalar_select %p192, %s16, 3
      %s194 = smul.addr %s193, 2
      %s195 = scalar_lea.vmem %s4, %s194
      %s196 = smul.u32 4, %s16
      %p197 = scmp.lt.s32.totalorder %s196, 15
      %s198 = scalar_select %p197, %s196, 15
      %s199 = smul.addr %s198, 8
      %s200 = scalar_lea.vmem %s0, %s199
      %s201 = smul.u32 4, %s16
      %s202 = smul.u32 4, %s16
      %p203 = scmp.lt.s32.totalorder %s202, 15
      %s204 = scalar_select %p203, %s202, 15
      %s205 = smul.addr %s204, 8
      %s206 = scalar_lea.vmem %s3, %s205
      %s207 = smul.u32 4, %s16
      %p208 = scmp.lt.s32.totalorder %s16, 3
      %s209 = scalar_select %p208, %s16, 3
      %s210 = smul.addr %s209, 2
      %s211 = scalar_lea.vmem %s4, %s210
      %v212 = vld [vmem:[%s200] sm:$0xff]
      %v213 = vld [vmem:[%s200 + $0x8] sm:$0xff]
      %v214 = vld [vmem:[%s200 + $0x10] sm:$0xff]
      %v215 = vld [vmem:[%s200 + $0x18] sm:$0xff]
      %v216 = vld [vmem:[%s1] sm:$0xff]
      %v217 = vld [vmem:[%s1 + $0x8] sm:$0xff]
      %v218 = vld [vmem:[%s1 + $0x10] sm:$0xff]
      %v219 = vld [vmem:[%s1 + $0x18] sm:$0xff]
      %v220 = vld [vmem:[%s1 + $0x20] sm:$0xff]
      %v221 = vld [vmem:[%s1 + $0x28] sm:$0xff]
      %v222 = vld [vmem:[%s1 + $0x30] sm:$0xff]
      %v223 = vld [vmem:[%s1 + $0x38] sm:$0xff]
      %v224 = vld [vmem:[%s1 + $0x40] sm:$0xff]
      %v225 = vld [vmem:[%s1 + $0x48] sm:$0xff]
      %v226 = vld [vmem:[%s1 + $0x50] sm:$0xff]
      %v227 = vld [vmem:[%s1 + $0x58] sm:$0xff]
      %v228 = vld [vmem:[%s1 + $0x60] sm:$0xff]
      %v229 = vld [vmem:[%s1 + $0x68] sm:$0xff]
      %v230 = vld [vmem:[%s1 + $0x70] sm:$0xff]
      %v231 = vld [vmem:[%s1 + $0x78] sm:$0xff]
      %v232 = vld [vmem:[%s2] sm:$0x1]
      %v234 = vperm.slane %v232, 0
      %236 = vmatpush.msra.mxu0 %v231
      %237 = vmatpush.msra.mxu0 %v230
      %238 = vmatpush.msra.mxu0 %v229
      %239 = vmatpush.msra.mxu0 %v228
      %240 = vmatpush.msra.mxu0 %v227
      %241 = vmatpush.msra.mxu0 %v226
      %242 = vmatpush.msra.mxu0 %v225
      %243 = vmatpush.msra.mxu0 %v224
      %244 = vmatpush.msra.mxu0 %v223
      %245 = vmatpush.msra.mxu0 %v222
      %246 = vmatpush.msra.mxu0 %v221
      %247 = vmatpush.msra.mxu0 %v220
      %248 = vmatpush.msra.mxu0 %v219
      %249 = vmatpush.msra.mxu0 %v218
      %250 = vmatpush.msra.mxu0 %v217
      %251 = vmatpush.msra.mxu0 %v216
      %252 = vmatmul.f32.gmra.mxu0 %v212
      %v253 = vpop.f32.mrf.mxu0
      %v254 = vadd.f32 %v234, %v253
      %255 = vmatmul.f32.gmra.mxu0 %v213
      %v256 = vpop.f32.mrf.mxu0
      %v257 = vadd.f32 %v234, %v256
      %258 = vmatmul.f32.gmra.mxu0 %v214
      %v259 = vpop.f32.mrf.mxu0
      %v260 = vadd.f32 %v234, %v259
      %261 = vmatmul.f32.gmra.mxu0 %v215
      %v262 = vpop.f32.mrf.mxu0
      %v263 = vadd.f32 %v234, %v262
      %264 = vdwg.mxu0
      %265 = vst [vmem:[%s206] sm:$0xff] %v254
      %266 = vst [vmem:[%s206 + $0x8] sm:$0xff] %v257
      %267 = vst [vmem:[%s206 + $0x10] sm:$0xff] %v260
      %268 = vst [vmem:[%s206 + $0x18] sm:$0xff] %v263
      %v269 = vadd.f32 %v254, %v257
      %v270 = vadd.f32 %v269, %v260
      %v271 = vadd.f32 %v270, %v263
      %v272 = vrot.slane %v271, 4
      %v273 = vadd.f32 %v271, %v272
      %v274 = vrot.slane %v273, 2
      %v275 = vadd.f32 %v273, %v274
      %v276 = vrot.slane %v275, 1
      %v277 = vadd.f32 %v275, %v276
      %v278 = vmul.f32 %v254, %v254
      %v279 = vmul.f32 %v257, %v257
      %v280 = vmul.f32 %v260, %v260
      %v281 = vmul.f32 %v263, %v263
      %v282 = vadd.f32 %v278, %v279
      %v283 = vadd.f32 %v282, %v280
      %v284 = vadd.f32 %v283, %v281
      %v285 = vrot.slane %v284, 4
      %v286 = vadd.f32 %v284, %v285
      %v287 = vrot.slane %v286, 2
      %v288 = vadd.f32 %v286, %v287
      %v289 = vrot.slane %v288, 1
      %v290 = vadd.f32 %v288, %v289
      %vm291 = vcmask 1040384
      %v292 = vsel %vm291, %v277, %v290
      %293 = vst [vmem:[%s211] sm:$0x3] %v292
      %s294 = smul.u32 4, %s16
      %p295 = scmp.lt.s32.totalorder %s294, 15
      %s296 = scalar_select %p295, %s294, 15
      %s297 = smul.addr %s296, 8
      %s298 = scalar_lea.vmem %s3, %s297
      %p299 = scmp.lt.s32.totalorder %s16, 3
      %s300 = scalar_select %p299, %s16, 3
      %s301 = smul.addr %s300, 2
      %s302 = scalar_lea.vmem %s4, %s301
      // Predicated region
      $region33: #{_lambda_.6} parent=31 // pred_check
        %p303 = pneg %p102
      $region34: #{_lambda_.6} parent=31 // pred_check_branch
        %305 = sbr.rel (%p303) target = $region36
      $region35: #{_lambda_.6} parent=31 // pred_region
        %s306 = smul.u32 4, %s16
      $region36: #{_lambda_.6} parent=31 // pred_fallthru
        _
      // Predicated region
      $region37: #{_lambda_.6} parent=31 // pred_check
        %p307 = pneg %p128
      $region38: #{_lambda_.6} parent=31 // pred_check_branch
        %309 = sbr.rel (%p307) target = $region40
      $region39: #{_lambda_.6} parent=31 // pred_region
        _
      $region40: #{_lambda_.6} parent=31 // pred_fallthru
        _
    $region32: #{_lambda_.6} parent=5 // pred_fallthru
      _
    %p310 = scmp.le.s32.totalorder 2, %s11
    // Predicated region
    $region41: #{_lambda_.6} parent=5 // pred_check
      %p311 = pneg %p310
    $region42: #{_lambda_.6} parent=5 // pred_check_branch
      %313 = sbr.rel (%p311) target = $region44
    $region43: #{_lambda_.6} parent=5 // pred_region
      %s314 = ssub.s32 %s11, 2
      // Predicated region
      $region45: #{_lambda_.6} parent=43 // pred_check
        %p315 = pneg %p108
      $region46: #{_lambda_.6} parent=43 // pred_check_branch
        %317 = sbr.rel (%p315) target = $region48
      $region47: #{_lambda_.6} parent=43 // pred_region
        %s318 = smul.u32 4, %s17
        %p319 = scmp.lt.s32.totalorder %s318, 15
        %s320 = scalar_select %p319, %s318, 15
        %s321 = smul.addr %s320, 8
        %s322 = scalar_lea.vmem %s3, %s321
      $region48: #{_lambda_.6} parent=43 // pred_fallthru
        _
      // Predicated region
      $region49: #{_lambda_.6} parent=43 // pred_check
        %p323 = pneg %p134
      $region50: #{_lambda_.6} parent=43 // pred_check_branch
        %325 = sbr.rel (%p323) target = $region52
      $region51: #{_lambda_.6} parent=43 // pred_region
        %p326 = scmp.lt.s32.totalorder %s17, 3
        %s327 = scalar_select %p326, %s17, 3
        %s328 = smul.addr %s327, 2
        %s329 = scalar_lea.vmem %s4, %s328
      $region52: #{_lambda_.6} parent=43 // pred_fallthru
        _
    $region44: #{_lambda_.6} parent=5 // pred_fallthru
      _
  $region6: #{_lambda_.6} parent=0 // loop_footer
    %s15 = sadd.s32 1, %s11
  $region7: #{_lambda_.6} parent=0 // loop_footer_branch
    %10 = sbr.rel target = $region3
  $region8: #{_lambda_.6} parent=0 // loop_exit
    _

// kernel: _lambda_.5
$region0: #{_lambda_.5}
  #allocation0 [shape = 'u32[]', space=smem, size = 0x4, offset = 0x4, fixed_abs, tag = 'smem constant byte address 0x4 - core index']
  #allocation1 [shape = 'u32[72,128]{1,0:T(1,128)}', space=vmem, size = 0x9000, scoped, tag = 'internal scratch']
  #allocation2 [shape = 'f32[80,128]{1,0:T(8,128)}', space=vmem, size = 0xa000, scoped, tag = 'scratch operand']
  %s0 = inlined_call_operand.vmem [shape: f32[128,128], index: 0, kind: input, shape index: {}]
  %s1 = inlined_call_operand.vmem [shape: f32[1,128], index: 1, kind: input, shape index: {}]
  %s2 = inlined_call_operand.vmem [shape: f32[1,128], index: 2, kind: input, shape index: {}]
  %s3 = inlined_call_operand.vmem [shape: f32[72,128], index: 3, kind: input, shape index: {}]
  %s4 = inlined_call_operand.vmem [shape: f32[1,128], index: 4, kind: input, shape index: {}]
  %s5 = inlined_call_operand.vmem [shape: f32[128,128], index: 5, kind: output, shape index: {0}]
  %s6 = inlined_call_operand.vmem [shape: f32[2,2,128], index: 6, kind: output, shape index: {1}]
  %7 = xla_tuple %s5, %s6
  %s8 = sld [smem:[#allocation0]]
  $region61: #{_lambda_.5} parent=0
    _
  %s10 = ssub.s32 1, %s8
  %s11 = scalar_select 0, %s10, %s8
  loop: start=0, step=1, limit=4
  $region2: #{_lambda_.5} parent=0 // loop_pre_header
    _
  $region3: #{_lambda_.5} parent=0 // loop_header
    %s13 = sphi 0, %s17
    %p14 = scmp.ge.s32.totalorder %s13, 4
    %s23 = sphi 0, %s25
    %s26 = sphi 0, %s23
    %s27 = sphi 0, %s26
    %s43 = sphi 0, %s27
    %s47 = sphi 0, %s47
    %s49 = sphi 0, %s47
    %s50 = sphi 0, %s49
    %s64 = sphi 0, %s50
    %s68 = sphi 0, %s68
    %s70 = sphi 0, %s68
    %s71 = sphi 0, %s70
    %s85 = sphi 0, %s71
    %s89 = sphi 0, %s89
    %s91 = sphi 0, %s89
    %s92 = sphi 0, %s91
    %s106 = sphi 0, %s92
    %s110 = sphi 0, %s110
    %s112 = sphi 0, %s110
    %s113 = sphi 0, %s112
    %s127 = sphi 0, %s113
    %s133 = sphi 0, %s135
    %s136 = sphi 0, %s133
    %s137 = sphi 0, %s136
    %s153 = sphi 0, %s137
    %s159 = sphi 0, %s161
    %s162 = sphi 0, %s159
    %s163 = sphi 0, %s162
    %s179 = sphi 0, %s163
  $region4: #{_lambda_.5} parent=0 // loop_header_branch
    %16 = sbr.rel (%p14) target = $region8
  $region5: #{_lambda_.5} parent=0 // loop_body
    %s18 = ssub.s32 %s13, 1
    %s19 = ssub.s32 %s13, 2
    %s20 = sadd.s32 %s13, 1
    %s21 = ssub.s32 %s13, %s20
    %p22 = scmp.eq.s32.totalorder %s21, 0
    %s24 = sadd.s32 %s23, 1
    %s25 = scalar_select %p22, %s23, %s24
    %p28 = pneg %p22
    %p29 = scmp.eq.s32.totalorder %s13, 1
    %p30 = por %p28, %p29
    %p31 = scmp.ne.s32.totalorder %s23, %s26
    %p32 = scmp.eq.s32.totalorder %s13, 0
    %p33 = por %p31, %p32
    %p34 = scmp.ne.s32.totalorder %s23, %s26
    %p35 = scmp.eq.s32.totalorder %s18, 1
    %p36 = por %p34, %p35
    %p37 = scmp.ne.s32.totalorder %s26, %s27
    %p38 = scmp.eq.s32.totalorder %s18, 0
    %p39 = por %p37, %p38
    %p40 = scmp.ne.s32.totalorder %s26, %s27
    %p41 = scmp.eq.s32.totalorder %s19, 1
    %p42 = por %p40, %p41
    %p44 = scmp.ne.s32.totalorder %s27, %s43
    %p45 = scmp.eq.s32.totalorder %s19, 0
    %p46 = por %p44, %p45
    %s48 = sadd.s32 %s47, 1
    %p51 = scmp.eq.s32.totalorder %s13, 1
    %p52 = scmp.ne.s32.totalorder %s47, %s49
    %p53 = scmp.eq.s32.totalorder %s13, 0
    %p54 = por %p52, %p53
    %p55 = scmp.ne.s32.totalorder %s47, %s49
    %p56 = scmp.eq.s32.totalorder %s18, 1
    %p57 = por %p55, %p56
    %p58 = scmp.ne.s32.totalorder %s49, %s50
    %p59 = scmp.eq.s32.totalorder %s18, 0
    %p60 = por %p58, %p59
    %p61 = scmp.ne.s32.totalorder %s49, %s50
    %p62 = scmp.eq.s32.totalorder %s19, 1
    %p63 = por %p61, %p62
    %p65 = scmp.ne.s32.totalorder %s50, %s64
    %p66 = scmp.eq.s32.totalorder %s19, 0
    %p67 = por %p65, %p66
    %s69 = sadd.s32 %s68, 1
    %p72 = scmp.eq.s32.totalorder %s13, 1
    %p73 = scmp.ne.s32.totalorder %s68, %s70
    %p74 = scmp.eq.s32.totalorder %s13, 0
    %p75 = por %p73, %p74
    %p76 = scmp.ne.s32.totalorder %s68, %s70
    %p77 = scmp.eq.s32.totalorder %s18, 1
    %p78 = por %p76, %p77
    %p79 = scmp.ne.s32.totalorder %s70, %s71
    %p80 = scmp.eq.s32.totalorder %s18, 0
    %p81 = por %p79, %p80
    %p82 = scmp.ne.s32.totalorder %s70, %s71
    %p83 = scmp.eq.s32.totalorder %s19, 1
    %p84 = por %p82, %p83
    %p86 = scmp.ne.s32.totalorder %s71, %s85
    %p87 = scmp.eq.s32.totalorder %s19, 0
    %p88 = por %p86, %p87
    %s90 = sadd.s32 %s89, 1
    %p93 = scmp.eq.s32.totalorder %s13, 1
    %p94 = scmp.ne.s32.totalorder %s89, %s91
    %p95 = scmp.eq.s32.totalorder %s13, 0
    %p96 = por %p94, %p95
    %p97 = scmp.ne.s32.totalorder %s89, %s91
    %p98 = scmp.eq.s32.totalorder %s18, 1
    %p99 = por %p97, %p98
    %p100 = scmp.ne.s32.totalorder %s91, %s92
    %p101 = scmp.eq.s32.totalorder %s18, 0
    %p102 = por %p100, %p101
    %p103 = scmp.ne.s32.totalorder %s91, %s92
    %p104 = scmp.eq.s32.totalorder %s19, 1
    %p105 = por %p103, %p104
    %p107 = scmp.ne.s32.totalorder %s92, %s106
    %p108 = scmp.eq.s32.totalorder %s19, 0
    %p109 = por %p107, %p108
    %s111 = sadd.s32 %s110, 1
    %p114 = scmp.eq.s32.totalorder %s13, 1
    %p115 = scmp.ne.s32.totalorder %s110, %s112
    %p116 = scmp.eq.s32.totalorder %s13, 0
    %p117 = por %p115, %p116
    %p118 = scmp.ne.s32.totalorder %s110, %s112
    %p119 = scmp.eq.s32.totalorder %s18, 1
    %p120 = por %p118, %p119
    %p121 = scmp.ne.s32.totalorder %s112, %s113
    %p122 = scmp.eq.s32.totalorder %s18, 0
    %p123 = por %p121, %p122
    %p124 = scmp.ne.s32.totalorder %s112, %s113
    %p125 = scmp.eq.s32.totalorder %s19, 1
    %p126 = por %p124, %p125
    %p128 = scmp.ne.s32.totalorder %s113, %s127
    %p129 = scmp.eq.s32.totalorder %s19, 0
    %p130 = por %p128, %p129
    %s131 = ssub.s32 %s13, %s20
    %p132 = scmp.eq.s32.totalorder %s131, 0
    %s134 = sadd.s32 %s133, 1
    %s135 = scalar_select %p132, %s133, %s134
    %p138 = pneg %p132
    %p139 = scmp.eq.s32.totalorder %s13, 1
    %p140 = por %p138, %p139
    %p141 = scmp.ne.s32.totalorder %s133, %s136
    %p142 = scmp.eq.s32.totalorder %s13, 0
    %p143 = por %p141, %p142
    %p144 = scmp.ne.s32.totalorder %s133, %s136
    %p145 = scmp.eq.s32.totalorder %s18, 1
    %p146 = por %p144, %p145
    %p147 = scmp.ne.s32.totalorder %s136, %s137
    %p148 = scmp.eq.s32.totalorder %s18, 0
    %p149 = por %p147, %p148
    %p150 = scmp.ne.s32.totalorder %s136, %s137
    %p151 = scmp.eq.s32.totalorder %s19, 1
    %p152 = por %p150, %p151
    %p154 = scmp.ne.s32.totalorder %s137, %s153
    %p155 = scmp.eq.s32.totalorder %s19, 0
    %p156 = por %p154, %p155
    %s157 = ssub.s32 %s13, %s20
    %p158 = scmp.eq.s32.totalorder %s157, 0
    %s160 = sadd.s32 %s159, 1
    %s161 = scalar_select %p158, %s159, %s160
    %p164 = pneg %p158
    %p165 = scmp.eq.s32.totalorder %s13, 1
    %p166 = por %p164, %p165
    %p167 = scmp.ne.s32.totalorder %s159, %s162
    %p168 = scmp.eq.s32.totalorder %s13, 0
    %p169 = por %p167, %p168
    %p170 = scmp.ne.s32.totalorder %s159, %s162
    %p171 = scmp.eq.s32.totalorder %s18, 1
    %p172 = por %p170, %p171
    %p173 = scmp.ne.s32.totalorder %s162, %s163
    %p174 = scmp.eq.s32.totalorder %s18, 0
    %p175 = por %p173, %p174
    %p176 = scmp.ne.s32.totalorder %s162, %s163
    %p177 = scmp.eq.s32.totalorder %s19, 1
    %p178 = por %p176, %p177
    %p180 = scmp.ne.s32.totalorder %s163, %s179
    %p181 = scmp.eq.s32.totalorder %s19, 0
    %p182 = por %p180, %p181
    %p183 = scmp.le.s32.totalorder 1, %s13
    %p184 = scmp.lt.s32.totalorder %s13, 3
    %p185 = pnand %p183, %p184
    %p186 = pneg %p185
    // Predicated region
    $region9: #{_lambda_.5} parent=5 // pred_check
      _
    $region10: #{_lambda_.5} parent=5 // pred_check_branch
      %188 = sbr.rel (%p185) target = $region12
    $region11: #{_lambda_.5} parent=5 // pred_region
      %s189 = ssub.s32 %s13, 1
      // Predicated region
      $region13: #{_lambda_.5} parent=11 // pred_check
        %p190 = pneg %p60
      $region14: #{_lambda_.5} parent=11 // pred_check_branch
        %192 = sbr.rel (%p190) target = $region16
      $region15: #{_lambda_.5} parent=11 // pred_region
        _
      $region16: #{_lambda_.5} parent=11 // pred_fallthru
        _
      // Predicated region
      $region17: #{_lambda_.5} parent=11 // pred_check
        %p193 = pneg %p81
      $region18: #{_lambda_.5} parent=11 // pred_check_branch
        %195 = sbr.rel (%p193) target = $region20
      $region19: #{_lambda_.5} parent=11 // pred_region
        _
      $region20: #{_lambda_.5} parent=11 // pred_fallthru
        _
      // Predicated region
      $region21: #{_lambda_.5} parent=11 // pred_check
        %p196 = pneg %p102
      $region22: #{_lambda_.5} parent=11 // pred_check_branch
        %198 = sbr.rel (%p196) target = $region24
      $region23: #{_lambda_.5} parent=11 // pred_region
        _
      $region24: #{_lambda_.5} parent=11 // pred_fallthru
        _
      // Predicated region
      $region25: #{_lambda_.5} parent=11 // pred_check
        %p199 = pneg %p123
      $region26: #{_lambda_.5} parent=11 // pred_check_branch
        %201 = sbr.rel (%p199) target = $region28
      $region27: #{_lambda_.5} parent=11 // pred_region
        _
      $region28: #{_lambda_.5} parent=11 // pred_fallthru
        _
    $region12: #{_lambda_.5} parent=5 // pred_fallthru
      _
    %p202 = scmp.lt.s32.totalorder %s13, 2
    // Predicated region
    $region29: #{_lambda_.5} parent=5 // pred_check
      %p203 = pneg %p202
    $region30: #{_lambda_.5} parent=5 // pred_check_branch
      %205 = sbr.rel (%p203) target = $region32
    $region31: #{_lambda_.5} parent=5 // pred_region
      // Predicated region
      $region33: #{_lambda_.5} parent=31 // pred_check
        %p206 = pneg %p33
      $region34: #{_lambda_.5} parent=31 // pred_check_branch
        %208 = sbr.rel (%p206) target = $region36
      $region35: #{_lambda_.5} parent=31 // pred_region
        %s209 = smul.u32 8, %s13
        %p210 = scmp.lt.s32.totalorder %s209, 15
        %s211 = scalar_select %p210, %s209, 15
        %s212 = smul.addr %s211, 8
        %s213 = scalar_lea.vmem %s0, %s212
        %s214 = smul.u32 8, %s13
      $region36: #{_lambda_.5} parent=31 // pred_fallthru
        _
    $region32: #{_lambda_.5} parent=5 // pred_fallthru
      _
    %p215 = scmp.le.s32.totalorder 1, %s13
    %p216 = scmp.lt.s32.totalorder %s13, 3
    %p217 = pnand %p215, %p216
    %p218 = pneg %p217
    // Predicated region
    $region37: #{_lambda_.5} parent=5 // pred_check
      _
    $region38: #{_lambda_.5} parent=5 // pred_check_branch
      %220 = sbr.rel (%p217) target = $region40
    $region39: #{_lambda_.5} parent=5 // pred_region
      %s221 = ssub.s32 %s13, 1
      %s222 = smul.u32 8, %s18
      %p223 = scmp.lt.s32.totalorder %s222, 15
      %s224 = scalar_select %p223, %s222, 15
      %s225 = smul.addr %s224, 8
      %s226 = scalar_lea.vmem %s0, %s225
      %p227 = pneg %p39
      %p228 = pneg %p36
      %p229 = pneg %p60
      %p230 = pneg %p57
      %p231 = pneg %p81
      %p232 = pneg %p78
      %p233 = pneg %p102
      %p234 = pneg %p99
      %p235 = pneg %p123
      %p236 = pneg %p120
      %p237 = pneg %p149
      %p238 = pneg %p146
      %s239 = smul.u32 8, %s18
      %p240 = scmp.lt.s32.totalorder %s239, 15
      %s241 = scalar_select %p240, %s239, 15
      %s242 = smul.addr %s241, 8
      %s243 = scalar_lea.vmem %s5, %s242
      %p244 = pneg %p175
      %p245 = pneg %p172
      %p246 = scmp.lt.s32.totalorder %s18, 1
      %s247 = scalar_select %p246, %s18, 1
      %s248 = smul.addr %s247, 2
      %s249 = scalar_lea.vmem %s6, %s248
      %s250 = smul.u32 8, %s18
      %p251 = scmp.lt.s32.totalorder %s250, 15
      %s252 = scalar_select %p251, %s250, 15
      %s253 = smul.addr %s252, 8
      %s254 = scalar_lea.vmem %s0, %s253
      %s255 = smul.u32 8, %s18
      %s256 = smul.u32 8, %s18
      %p257 = scmp.lt.s32.totalorder %s256, 15
      %s258 = scalar_select %p257, %s256, 15
      %s259 = smul.addr %s258, 8
      %s260 = scalar_lea.vmem %s5, %s259
      %s261 = smul.u32 8, %s18
      %p262 = scmp.lt.s32.totalorder %s18, 1
      %s263 = scalar_select %p262, %s18, 1
      %s264 = smul.addr %s263, 2
      %s265 = scalar_lea.vmem %s6, %s264
      %v266 = vld [vmem:[%s254] sm:$0xff]
      %v267 = vld [vmem:[%s254 + $0x8] sm:$0xff]
      %v268 = vld [vmem:[%s254 + $0x10] sm:$0xff]
      %v269 = vld [vmem:[%s254 + $0x18] sm:$0xff]
      %v270 = vld [vmem:[%s254 + $0x20] sm:$0xff]
      %v271 = vld [vmem:[%s254 + $0x28] sm:$0xff]
      %v272 = vld [vmem:[%s254 + $0x30] sm:$0xff]
      %v273 = vld [vmem:[%s254 + $0x38] sm:$0xff]
      %v274 = vld [vmem:[%s1] sm:$0x1]
      %v276 = vperm.slane %v274, 0
      %v278 = vmul.f32 %v266, %v276
      %v279 = vmul.f32 %v267, %v276
      %v280 = vmul.f32 %v268, %v276
      %v281 = vmul.f32 %v269, %v276
      %v282 = vmul.f32 %v270, %v276
      %v283 = vmul.f32 %v271, %v276
      %v284 = vmul.f32 %v272, %v276
      %v285 = vmul.f32 %v273, %v276
      %v286 = vld [vmem:[%s2] sm:$0x1]
      %v288 = vperm.slane %v286, 0
      %v290 = vadd.f32 %v278, %v288
      %v291 = vadd.f32 %v279, %v288
      %v292 = vadd.f32 %v280, %v288
      %v293 = vadd.f32 %v281, %v288
      %v294 = vadd.f32 %v282, %v288
      %v295 = vadd.f32 %v283, %v288
      %v296 = vadd.f32 %v284, %v288
      %v297 = vadd.f32 %v285, %v288
      %298 = vst [vmem:[#allocation2] sm:$0xff] 0.0
      %299 = vst [vmem:[#allocation2 + $0x48] sm:$0xff] 0.0
      %300 = vst [vmem:[#allocation2 + $0x8] sm:$0xff] %v290
      %301 = vst [vmem:[#allocation2 + $0x10] sm:$0xff] %v291
      %302 = vst [vmem:[#allocation2 + $0x18] sm:$0xff] %v292
      %303 = vst [vmem:[#allocation2 + $0x20] sm:$0xff] %v293
      %304 = vst [vmem:[#allocation2 + $0x28] sm:$0xff] %v294
      %305 = vst [vmem:[#allocation2 + $0x30] sm:$0xff] %v295
      %306 = vst [vmem:[#allocation2 + $0x38] sm:$0xff] %v296
      %307 = vst [vmem:[#allocation2 + $0x40] sm:$0xff] %v297
      %v308 = vld [vmem:[%s3] sm:$0xff]
      %v309 = vld [vmem:[%s3 + $0x8] sm:$0xff]
      %v310 = vld [vmem:[%s3 + $0x10] sm:$0xff]
      %v311 = vld [vmem:[%s3 + $0x18] sm:$0xff]
      %v312 = vld [vmem:[%s3 + $0x20] sm:$0xff]
      %v313 = vld [vmem:[%s3 + $0x28] sm:$0xff]
      %v314 = vld [vmem:[%s3 + $0x30] sm:$0xff]
      %v315 = vld [vmem:[%s3 + $0x38] sm:$0xff]
      %v316 = vld [vmem:[%s3 + $0x40] sm:$0xff]
      %v317 = vld [vmem:[#allocation2] sm:$0xff]
      %v318 = vld [vmem:[#allocation2 + $0x8] sm:$0xff]
      %v319 = vld [vmem:[#allocation2 + $0x10] sm:$0xff]
      %v320 = vld [vmem:[#allocation2 + $0x18] sm:$0xff]
      %v321 = vld [vmem:[#allocation2 + $0x20] sm:$0xff]
      %v322 = vld [vmem:[#allocation2 + $0x28] sm:$0xff]
      %v323 = vld [vmem:[#allocation2 + $0x30] sm:$0xff]
      %v324 = vld [vmem:[#allocation2 + $0x38] sm:$0xff]
      %v325 = vrot.slane %v317, 7
      %v326 = vrot.slane %v318, 7
      %v327 = vrot.slane %v319, 7
      %v328 = vrot.slane %v320, 7
      %v329 = vrot.slane %v321, 7
      %v330 = vrot.slane %v322, 7
      %v331 = vrot.slane %v323, 7
      %v332 = vrot.slane %v324, 7
      %v333 = vlaneseq
      %v334 = vshrl.u32 %v333, 7
      %vm335 = vcmp.lt.s32.totalorder %v334, 1
      %v336 = vsel %vm335, %v331, %v332
      %v337 = vsel %vm335, %v330, %v331
      %v338 = vsel %vm335, %v329, %v330
      %v339 = vsel %vm335, %v328, %v329
      %v340 = vsel %vm335, %v327, %v328
      %v341 = vsel %vm335, %v326, %v327
      %v342 = vsel %vm335, %v325, %v326
      %v343 = vsel %vm335, %v332, %v325
      %v344 = vmul.f32 %v343, %v308
      %v345 = vmul.f32 %v342, %v308
      %v346 = vmul.f32 %v341, %v308
      %v347 = vmul.f32 %v340, %v308
      %v348 = vmul.f32 %v339, %v308
      %v349 = vmul.f32 %v338, %v308
      %v350 = vmul.f32 %v337, %v308
      %v351 = vmul.f32 %v336, %v308
      %v352 = vmul.f32 %v317, %v309
      %v353 = vmul.f32 %v318, %v309
      %v354 = vmul.f32 %v319, %v309
      %v355 = vmul.f32 %v320, %v309
      %v356 = vmul.f32 %v321, %v309
      %v357 = vmul.f32 %v322, %v309
      %v358 = vmul.f32 %v323, %v309
      %v359 = vmul.f32 %v324, %v309
      %v360 = vadd.f32 %v344, %v352
      %v361 = vadd.f32 %v345, %v353
      %v362 = vadd.f32 %v346, %v354
      %v363 = vadd.f32 %v347, %v355
      %v364 = vadd.f32 %v348, %v356
      %v365 = vadd.f32 %v349, %v357
      %v366 = vadd.f32 %v350, %v358
      %v367 = vadd.f32 %v351, %v359
      %v368 = vrot.slane %v317, 1
      %v369 = vrot.slane %v318, 1
      %v370 = vrot.slane %v319, 1
      %v371 = vrot.slane %v320, 1
      %v372 = vrot.slane %v321, 1
      %v373 = vrot.slane %v322, 1
      %v374 = vrot.slane %v323, 1
      %v375 = vrot.slane %v324, 1
      %vm376 = vcmp.lt.s32.totalorder %v334, 7
      %v377 = vsel %vm376, %v374, %v375
      %v378 = vsel %vm376, %v373, %v374
      %v379 = vsel %vm376, %v372, %v373
      %v380 = vsel %vm376, %v371, %v372
      %v381 = vsel %vm376, %v370, %v371
      %v382 = vsel %vm376, %v369, %v370
      %v383 = vsel %vm376, %v368, %v369
      %v384 = vsel %vm376, %v375, %v368
      %v385 = vmul.f32 %v383, %v310
      %v386 = vmul.f32 %v382, %v310
      %v387 = vmul.f32 %v381, %v310
      %v388 = vmul.f32 %v380, %v310
      %v389 = vmul.f32 %v379, %v310
      %v390 = vmul.f32 %v378, %v310
      %v391 = vmul.f32 %v377, %v310
      %v392 = vmul.f32 %v384, %v310
      %v393 = vadd.f32 %v360, %v385
      %v394 = vadd.f32 %v361, %v386
      %v395 = vadd.f32 %v362, %v387
      %v396 = vadd.f32 %v363, %v388
      %v397 = vadd.f32 %v364, %v389
      %v398 = vadd.f32 %v365, %v390
      %v399 = vadd.f32 %v366, %v391
      %v400 = vadd.f32 %v367, %v392
      %v401 = vrot.slane %v290, 7
      %v402 = vrot.slane %v291, 7
      %v403 = vrot.slane %v292, 7
      %v404 = vrot.slane %v293, 7
      %v405 = vrot.slane %v294, 7
      %v406 = vrot.slane %v295, 7
      %v407 = vrot.slane %v296, 7
      %v408 = vrot.slane %v297, 7
      %v409 = vsel %vm335, %v407, %v408
      %v410 = vsel %vm335, %v406, %v407
      %v411 = vsel %vm335, %v405, %v406
      %v412 = vsel %vm335, %v404, %v405
      %v413 = vsel %vm335, %v403, %v404
      %v414 = vsel %vm335, %v402, %v403
      %v415 = vsel %vm335, %v401, %v402
      %v416 = vsel %vm335, %v408, %v401
      %v417 = vmul.f32 %v416, %v311
      %v418 = vmul.f32 %v415, %v311
      %v419 = vmul.f32 %v414, %v311
      %v420 = vmul.f32 %v413, %v311
      %v421 = vmul.f32 %v412, %v311
      %v422 = vmul.f32 %v411, %v311
      %v423 = vmul.f32 %v410, %v311
      %v424 = vmul.f32 %v409, %v311
      %v425 = vadd.f32 %v393, %v417
      %v426 = vadd.f32 %v394, %v418
      %v427 = vadd.f32 %v395, %v419
      %v428 = vadd.f32 %v396, %v420
      %v429 = vadd.f32 %v397, %v421
      %v430 = vadd.f32 %v398, %v422
      %v431 = vadd.f32 %v399, %v423
      %v432 = vadd.f32 %v400, %v424
      %v433 = vmul.f32 %v290, %v312
      %v434 = vmul.f32 %v291, %v312
      %v435 = vmul.f32 %v292, %v312
      %v436 = vmul.f32 %v293, %v312
      %v437 = vmul.f32 %v294, %v312
      %v438 = vmul.f32 %v295, %v312
      %v439 = vmul.f32 %v296, %v312
      %v440 = vmul.f32 %v297, %v312
      %v441 = vadd.f32 %v425, %v433
      %v442 = vadd.f32 %v426, %v434
      %v443 = vadd.f32 %v427, %v435
      %v444 = vadd.f32 %v428, %v436
      %v445 = vadd.f32 %v429, %v437
      %v446 = vadd.f32 %v430, %v438
      %v447 = vadd.f32 %v431, %v439
      %v448 = vadd.f32 %v432, %v440
      %v449 = vrot.slane %v290, 1
      %v450 = vrot.slane %v291, 1
      %v451 = vrot.slane %v292, 1
      %v452 = vrot.slane %v293, 1
      %v453 = vrot.slane %v294, 1
      %v454 = vrot.slane %v295, 1
      %v455 = vrot.slane %v296, 1
      %v456 = vrot.slane %v297, 1
      %v457 = vsel %vm376, %v455, %v456
      %v458 = vsel %vm376, %v454, %v455
      %v459 = vsel %vm376, %v453, %v454
      %v460 = vsel %vm376, %v452, %v453
      %v461 = vsel %vm376, %v451, %v452
      %v462 = vsel %vm376, %v450, %v451
      %v463 = vsel %vm376, %v449, %v450
      %v464 = vsel %vm376, %v456, %v449
      %v465 = vmul.f32 %v463, %v313
      %v466 = vmul.f32 %v462, %v313
      %v467 = vmul.f32 %v461, %v313
      %v468 = vmul.f32 %v460, %v313
      %v469 = vmul.f32 %v459, %v313
      %v470 = vmul.f32 %v458, %v313
      %v471 = vmul.f32 %v457, %v313
      %v472 = vmul.f32 %v464, %v313
      %v473 = vadd.f32 %v441, %v465
      %v474 = vadd.f32 %v442, %v466
      %v475 = vadd.f32 %v443, %v467
      %v476 = vadd.f32 %v444, %v468
      %v477 = vadd.f32 %v445, %v469
      %v478 = vadd.f32 %v446, %v470
      %v479 = vadd.f32 %v447, %v471
      %v480 = vadd.f32 %v448, %v472
      %v481 = vld [vmem:[#allocation2 + $0x10] sm:$0xff]
      %v482 = vld [vmem:[#allocation2 + $0x18] sm:$0xff]
      %v483 = vld [vmem:[#allocation2 + $0x20] sm:$0xff]
      %v484 = vld [vmem:[#allocation2 + $0x28] sm:$0xff]
      %v485 = vld [vmem:[#allocation2 + $0x30] sm:$0xff]
      %v486 = vld [vmem:[#allocation2 + $0x38] sm:$0xff]
      %v487 = vld [vmem:[#allocation2 + $0x40] sm:$0xff]
      %v488 = vld [vmem:[#allocation2 + $0x48] sm:$0xff]
      %v489 = vrot.slane %v481, 7
      %v490 = vrot.slane %v482, 7
      %v491 = vrot.slane %v483, 7
      %v492 = vrot.slane %v484, 7
      %v493 = vrot.slane %v485, 7
      %v494 = vrot.slane %v486, 7
      %v495 = vrot.slane %v487, 7
      %v496 = vrot.slane %v488, 7
      %v497 = vsel %vm335, %v495, %v496
      %v498 = vsel %vm335, %v494, %v495
      %v499 = vsel %vm335, %v493, %v494
      %v500 = vsel %vm335, %v492, %v493
      %v501 = vsel %vm335, %v491, %v492
      %v502 = vsel %vm335, %v490, %v491
      %v503 = vsel %vm335, %v489, %v490
      %v504 = vsel %vm335, %v496, %v489
      %v505 = vmul.f32 %v504, %v314
      %v506 = vmul.f32 %v503, %v314
      %v507 = vmul.f32 %v502, %v314
      %v508 = vmul.f32 %v501, %v314
      %v509 = vmul.f32 %v500, %v314
      %v510 = vmul.f32 %v499, %v314
      %v511 = vmul.f32 %v498, %v314
      %v512 = vmul.f32 %v497, %v314
      %v513 = vadd.f32 %v473, %v505
      %v514 = vadd.f32 %v474, %v506
      %v515 = vadd.f32 %v475, %v507
      %v516 = vadd.f32 %v476, %v508
      %v517 = vadd.f32 %v477, %v509
      %v518 = vadd.f32 %v478, %v510
      %v519 = vadd.f32 %v479, %v511
      %v520 = vadd.f32 %v480, %v512
      %v521 = vmul.f32 %v481, %v315
      %v522 = vmul.f32 %v482, %v315
      %v523 = vmul.f32 %v483, %v315
      %v524 = vmul.f32 %v484, %v315
      %v525 = vmul.f32 %v485, %v315
      %v526 = vmul.f32 %v486, %v315
      %v527 = vmul.f32 %v487, %v315
      %v528 = vmul.f32 %v488, %v315
      %v529 = vadd.f32 %v513, %v521
      %v530 = vadd.f32 %v514, %v522
      %v531 = vadd.f32 %v515, %v523
      %v532 = vadd.f32 %v516, %v524
      %v533 = vadd.f32 %v517, %v525
      %v534 = vadd.f32 %v518, %v526
      %v535 = vadd.f32 %v519, %v527
      %v536 = vadd.f32 %v520, %v528
      %v537 = vrot.slane %v481, 1
      %v538 = vrot.slane %v482, 1
      %v539 = vrot.slane %v483, 1
      %v540 = vrot.slane %v484, 1
      %v541 = vrot.slane %v485, 1
      %v542 = vrot.slane %v486, 1
      %v543 = vrot.slane %v487, 1
      %v544 = vrot.slane %v488, 1
      %v545 = vsel %vm376, %v543, %v544
      %v546 = vsel %vm376, %v542, %v543
      %v547 = vsel %vm376, %v541, %v542
      %v548 = vsel %vm376, %v540, %v541
      %v549 = vsel %vm376, %v539, %v540
      %v550 = vsel %vm376, %v538, %v539
      %v551 = vsel %vm376, %v537, %v538
      %v552 = vsel %vm376, %v544, %v537
      %v553 = vmul.f32 %v551, %v316
      %v554 = vmul.f32 %v550, %v316
      %v555 = vmul.f32 %v549, %v316
      %v556 = vmul.f32 %v548, %v316
      %v557 = vmul.f32 %v547, %v316
      %v558 = vmul.f32 %v546, %v316
      %v559 = vmul.f32 %v545, %v316
      %v560 = vmul.f32 %v552, %v316
      %v561 = vadd.f32 %v529, %v553
      %v562 = vadd.f32 %v530, %v554
      %v563 = vadd.f32 %v531, %v555
      %v564 = vadd.f32 %v532, %v556
      %v565 = vadd.f32 %v533, %v557
      %v566 = vadd.f32 %v534, %v558
      %v567 = vadd.f32 %v535, %v559
      %v568 = vadd.f32 %v536, %v560
      %v569 = vld [vmem:[%s4] sm:$0x1]
      %v571 = vperm.slane %v569, 0
      %v573 = vadd.f32 %v561, %v571
      %v574 = vadd.f32 %v562, %v571
      %v575 = vadd.f32 %v563, %v571
      %v576 = vadd.f32 %v564, %v571
      %v577 = vadd.f32 %v565, %v571
      %v578 = vadd.f32 %v566, %v571
      %v579 = vadd.f32 %v567, %v571
      %v580 = vadd.f32 %v568, %v571
      %v581 = vadd.f32 %v573, %v290
      %v582 = vadd.f32 %v574, %v291
      %v583 = vadd.f32 %v575, %v292
      %v584 = vadd.f32 %v576, %v293
      %v585 = vadd.f32 %v577, %v294
      %v586 = vadd.f32 %v578, %v295
      %v587 = vadd.f32 %v579, %v296
      %v588 = vadd.f32 %v580, %v297
      %vm589 = vcmp.lt.f32.partialorder %v581, 1.0
      %vm590 = vcmp.lt.f32.partialorder %v582, 1.0
      %vm591 = vcmp.lt.f32.partialorder %v583, 1.0
      %vm592 = vcmp.lt.f32.partialorder %v584, 1.0
      %vm593 = vcmp.lt.f32.partialorder %v585, 1.0
      %vm594 = vcmp.lt.f32.partialorder %v586, 1.0
      %vm595 = vcmp.lt.f32.partialorder %v587, 1.0
      %vm596 = vcmp.lt.f32.partialorder %v588, 1.0
      %vm597 = vcmp.gt.f32.partialorder %v581, -3.0
      %vm598 = vcmp.gt.f32.partialorder %v582, -3.0
      %vm599 = vcmp.gt.f32.partialorder %v583, -3.0
      %vm600 = vcmp.gt.f32.partialorder %v584, -3.0
      %vm601 = vcmp.gt.f32.partialorder %v585, -3.0
      %vm602 = vcmp.gt.f32.partialorder %v586, -3.0
      %vm603 = vcmp.gt.f32.partialorder %v587, -3.0
      %vm604 = vcmp.gt.f32.partialorder %v588, -3.0
      %vm605 = vcmp.le.f32.partialorder %v581, -1.0
      %vm606 = vcmp.le.f32.partialorder %v582, -1.0
      %vm607 = vcmp.le.f32.partialorder %v583, -1.0
      %vm608 = vcmp.le.f32.partialorder %v584, -1.0
      %vm609 = vcmp.le.f32.partialorder %v585, -1.0
      %vm610 = vcmp.le.f32.partialorder %v586, -1.0
      %vm611 = vcmp.le.f32.partialorder %v587, -1.0
      %vm612 = vcmp.le.f32.partialorder %v588, -1.0
      %vm613 = vmand %vm597, %vm605
      %vm614 = vmand %vm598, %vm606
      %vm615 = vmand %vm599, %vm607
      %vm616 = vmand %vm600, %vm608
      %vm617 = vmand %vm601, %vm609
      %vm618 = vmand %vm602, %vm610
      %vm619 = vmand %vm603, %vm611
      %vm620 = vmand %vm604, %vm612
      %v621 = vadd.f32 %v581, 3.0
      %v622 = vadd.f32 %v582, 3.0
      %v623 = vadd.f32 %v583, 3.0
      %v624 = vadd.f32 %v584, 3.0
      %v625 = vadd.f32 %v585, 3.0
      %v626 = vadd.f32 %v586, 3.0
      %v627 = vadd.f32 %v587, 3.0
      %v628 = vadd.f32 %v588, 3.0
      %v629 = vmul.f32 %v621, -0.07728577
      %v630 = vmul.f32 %v622, -0.07728577
      %v631 = vmul.f32 %v623, -0.07728577
      %v632 = vmul.f32 %v624, -0.07728577
      %v633 = vmul.f32 %v625, -0.07728577
      %v634 = vmul.f32 %v626, -0.07728577
      %v635 = vmul.f32 %v627, -0.07728577
      %v636 = vmul.f32 %v628, -0.07728577
      %v637 = vsub.f32 %v629, 0.0039978027
      %v638 = vsub.f32 %v630, 0.0039978027
      %v639 = vsub.f32 %v631, 0.0039978027
      %v640 = vsub.f32 %v632, 0.0039978027
      %v641 = vsub.f32 %v633, 0.0039978027
      %v642 = vsub.f32 %v634, 0.0039978027
      %v643 = vsub.f32 %v635, 0.0039978027
      %v644 = vsub.f32 %v636, 0.0039978027
      %v645 = vsel %vm613, %v637, 0.0
      %v646 = vsel %vm614, %v638, 0.0
      %v647 = vsel %vm615, %v639, 0.0
      %v648 = vsel %vm616, %v640, 0.0
      %v649 = vsel %vm617, %v641, 0.0
      %v650 = vsel %vm618, %v642, 0.0
      %v651 = vsel %vm619, %v643, 0.0
      %v652 = vsel %vm620, %v644, 0.0
      %vm653 = vcmp.lt.f32.partialorder %v581, 0.0
      %vm654 = vcmp.lt.f32.partialorder %v582, 0.0
      %vm655 = vcmp.lt.f32.partialorder %v583, 0.0
      %vm656 = vcmp.lt.f32.partialorder %v584, 0.0
      %vm657 = vcmp.lt.f32.partialorder %v585, 0.0
      %vm658 = vcmp.lt.f32.partialorder %v586, 0.0
      %vm659 = vcmp.lt.f32.partialorder %v587, 0.0
      %vm660 = vcmp.lt.f32.partialorder %v588, 0.0
      %v661 = vsel %vm653, 0.1586914, 0.8412781
      %v662 = vsel %vm654, 0.1586914, 0.8412781
      %v663 = vsel %vm655, 0.1586914, 0.8412781
      %v664 = vsel %vm656, 0.1586914, 0.8412781
      %v665 = vsel %vm657, 0.1586914, 0.8412781
      %v666 = vsel %vm658, 0.1586914, 0.8412781
      %v667 = vsel %vm659, 0.1586914, 0.8412781
      %v668 = vsel %vm660, 0.1586914, 0.8412781
      %vm669 = vcmp.ge.f32.partialorder %v581, -1.0
      %vm670 = vcmp.ge.f32.partialorder %v582, -1.0
      %vm671 = vcmp.ge.f32.partialorder %v583, -1.0
      %vm672 = vcmp.ge.f32.partialorder %v584, -1.0
      %vm673 = vcmp.ge.f32.partialorder %v585, -1.0
      %vm674 = vcmp.ge.f32.partialorder %v586, -1.0
      %vm675 = vcmp.ge.f32.partialorder %v587, -1.0
      %vm676 = vcmp.ge.f32.partialorder %v588, -1.0
      %vm677 = vmand %vm669, %vm589
      %vm678 = vmand %vm670, %vm590
      %vm679 = vmand %vm671, %vm591
      %vm680 = vmand %vm672, %vm592
      %vm681 = vmand %vm673, %vm593
      %vm682 = vmand %vm674, %vm594
      %vm683 = vmand %vm675, %vm595
      %vm684 = vmand %vm676, %vm596
      %v685 = vmul.f32 %v661, %v581
      %v686 = vmul.f32 %v662, %v582
      %v687 = vmul.f32 %v663, %v583
      %v688 = vmul.f32 %v664, %v584
      %v689 = vmul.f32 %v665, %v585
      %v690 = vmul.f32 %v666, %v586
      %v691 = vmul.f32 %v667, %v587
      %v692 = vmul.f32 %v668, %v588
      %v693 = vsel %vm677, %v685, 0.0
      %v694 = vsel %vm678, %v686, 0.0
      %v695 = vsel %vm679, %v687, 0.0
      %v696 = vsel %vm680, %v688, 0.0
      %v697 = vsel %vm681, %v689, 0.0
      %v698 = vsel %vm682, %v690, 0.0
      %v699 = vsel %vm683, %v691, 0.0
      %v700 = vsel %vm684, %v692, 0.0
      %vm701 = vcmp.lt.f32.partialorder %v581, 3.0
      %vm702 = vcmp.lt.f32.partialorder %v582, 3.0
      %vm703 = vcmp.lt.f32.partialorder %v583, 3.0
      %vm704 = vcmp.lt.f32.partialorder %v584, 3.0
      %vm705 = vcmp.lt.f32.partialorder %v585, 3.0
      %vm706 = vcmp.lt.f32.partialorder %v586, 3.0
      %vm707 = vcmp.lt.f32.partialorder %v587, 3.0
      %vm708 = vcmp.lt.f32.partialorder %v588, 3.0
      %v709 = vsub.f32 %v581, 1.0
      %v710 = vsub.f32 %v582, 1.0
      %v711 = vsub.f32 %v583, 1.0
      %v712 = vsub.f32 %v584, 1.0
      %v713 = vsub.f32 %v585, 1.0
      %v714 = vsub.f32 %v586, 1.0
      %v715 = vsub.f32 %v587, 1.0
      %v716 = vsub.f32 %v588, 1.0
      %v717 = vmul.f32 %v709, 1.0772858
      %v718 = vmul.f32 %v710, 1.0772858
      %v719 = vmul.f32 %v711, 1.0772858
      %v720 = vmul.f32 %v712, 1.0772858
      %v721 = vmul.f32 %v713, 1.0772858
      %v722 = vmul.f32 %v714, 1.0772858
      %v723 = vmul.f32 %v715, 1.0772858
      %v724 = vmul.f32 %v716, 1.0772858
      %v725 = vadd.f32 %v717, 0.8412781
      %v726 = vadd.f32 %v718, 0.8412781
      %v727 = vadd.f32 %v719, 0.8412781
      %v728 = vadd.f32 %v720, 0.8412781
      %v729 = vadd.f32 %v721, 0.8412781
      %v730 = vadd.f32 %v722, 0.8412781
      %v731 = vadd.f32 %v723, 0.8412781
      %v732 = vadd.f32 %v724, 0.8412781
      %v733 = vsel %vm701, %v725, %v581
      %v734 = vsel %vm702, %v726, %v582
      %v735 = vsel %vm703, %v727, %v583
      %v736 = vsel %vm704, %v728, %v584
      %v737 = vsel %vm705, %v729, %v585
      %v738 = vsel %vm706, %v730, %v586
      %v739 = vsel %vm707, %v731, %v587
      %v740 = vsel %vm708, %v732, %v588
      %v741 = vsel %vm589, 0.0, %v733
      %v742 = vsel %vm590, 0.0, %v734
      %v743 = vsel %vm591, 0.0, %v735
      %v744 = vsel %vm592, 0.0, %v736
      %v745 = vsel %vm593, 0.0, %v737
      %v746 = vsel %vm594, 0.0, %v738
      %v747 = vsel %vm595, 0.0, %v739
      %v748 = vsel %vm596, 0.0, %v740
      %v749 = vadd.f32 %v645, %v693
      %v750 = vadd.f32 %v646, %v694
      %v751 = vadd.f32 %v647, %v695
      %v752 = vadd.f32 %v648, %v696
      %v753 = vadd.f32 %v649, %v697
      %v754 = vadd.f32 %v650, %v698
      %v755 = vadd.f32 %v651, %v699
      %v756 = vadd.f32 %v652, %v700
      %v757 = vadd.f32 %v749, %v741
      %v758 = vadd.f32 %v750, %v742
      %v759 = vadd.f32 %v751, %v743
      %v760 = vadd.f32 %v752, %v744
      %v761 = vadd.f32 %v753, %v745
      %v762 = vadd.f32 %v754, %v746
      %v763 = vadd.f32 %v755, %v747
      %v764 = vadd.f32 %v756, %v748
      %765 = vst [vmem:[%s260] sm:$0xff] %v757
      %766 = vst [vmem:[%s260 + $0x8] sm:$0xff] %v758
      %767 = vst [vmem:[%s260 + $0x10] sm:$0xff] %v759
      %768 = vst [vmem:[%s260 + $0x18] sm:$0xff] %v760
      %769 = vst [vmem:[%s260 + $0x20] sm:$0xff] %v761
      %770 = vst [vmem:[%s260 + $0x28] sm:$0xff] %v762
      %771 = vst [vmem:[%s260 + $0x30] sm:$0xff] %v763
      %772 = vst [vmem:[%s260 + $0x38] sm:$0xff] %v764
      %v773 = vadd.f32 %v757, %v758
      %v774 = vadd.f32 %v773, %v759
      %v775 = vadd.f32 %v774, %v760
      %v776 = vadd.f32 %v775, %v761
      %v777 = vadd.f32 %v776, %v762
      %v778 = vadd.f32 %v777, %v763
      %v779 = vadd.f32 %v778, %v764
      %v780 = vrot.slane %v779, 4
      %v781 = vadd.f32 %v779, %v780
      %v782 = vrot.slane %v781, 2
      %v783 = vadd.f32 %v781, %v782
      %v784 = vrot.slane %v783, 1
      %v785 = vadd.f32 %v783, %v784
      %v786 = vmul.f32 %v757, %v757
      %v787 = vmul.f32 %v758, %v758
      %v788 = vmul.f32 %v759, %v759
      %v789 = vmul.f32 %v760, %v760
      %v790 = vmul.f32 %v761, %v761
      %v791 = vmul.f32 %v762, %v762
      %v792 = vmul.f32 %v763, %v763
      %v793 = vmul.f32 %v764, %v764
      %v794 = vadd.f32 %v786, %v787
      %v795 = vadd.f32 %v794, %v788
      %v796 = vadd.f32 %v795, %v789
      %v797 = vadd.f32 %v796, %v790
      %v798 = vadd.f32 %v797, %v791
      %v799 = vadd.f32 %v798, %v792
      %v800 = vadd.f32 %v799, %v793
      %v801 = vrot.slane %v800, 4
      %v802 = vadd.f32 %v800, %v801
      %v803 = vrot.slane %v802, 2
      %v804 = vadd.f32 %v802, %v803
      %v805 = vrot.slane %v804, 1
      %v806 = vadd.f32 %v804, %v805
      %vm807 = vcmask 1040384
      %v808 = vsel %vm807, %v785, %v806
      %809 = vst [vmem:[%s265] sm:$0x3] %v808
      %s810 = smul.u32 8, %s18
      %p811 = scmp.lt.s32.totalorder %s810, 15
      %s812 = scalar_select %p811, %s810, 15
      %s813 = smul.addr %s812, 8
      %s814 = scalar_lea.vmem %s5, %s813
      %p815 = scmp.lt.s32.totalorder %s18, 1
      %s816 = scalar_select %p815, %s18, 1
      %s817 = smul.addr %s816, 2
      %s818 = scalar_lea.vmem %s6, %s817
      // Predicated region
      $region41: #{_lambda_.5} parent=39 // pred_check
        %p819 = pneg %p146
      $region42: #{_lambda_.5} parent=39 // pred_check_branch
        %821 = sbr.rel (%p819) target = $region44
      $region43: #{_lambda_.5} parent=39 // pred_region
        %s822 = smul.u32 8, %s18
      $region44: #{_lambda_.5} parent=39 // pred_fallthru
        _
      // Predicated region
      $region45: #{_lambda_.5} parent=39 // pred_check
        %p823 = pneg %p172
      $region46: #{_lambda_.5} parent=39 // pred_check_branch
        %825 = sbr.rel (%p823) target = $region48
      $region47: #{_lambda_.5} parent=39 // pred_region
        _
      $region48: #{_lambda_.5} parent=39 // pred_fallthru
        _
    $region40: #{_lambda_.5} parent=5 // pred_fallthru
      _
    %p826 = scmp.le.s32.totalorder 2, %s13
    // Predicated region
    $region49: #{_lambda_.5} parent=5 // pred_check
      %p827 = pneg %p826
    $region50: #{_lambda_.5} parent=5 // pred_check_branch
      %829 = sbr.rel (%p827) target = $region52
    $region51: #{_lambda_.5} parent=5 // pred_region
      %s830 = ssub.s32 %s13, 2
      // Predicated region
      $region53: #{_lambda_.5} parent=51 // pred_check
        %p831 = pneg %p152
      $region54: #{_lambda_.5} parent=51 // pred_check_branch
        %833 = sbr.rel (%p831) target = $region56
      $region55: #{_lambda_.5} parent=51 // pred_region
        %s834 = smul.u32 8, %s19
        %p835 = scmp.lt.s32.totalorder %s834, 15
        %s836 = scalar_select %p835, %s834, 15
        %s837 = smul.addr %s836, 8
        %s838 = scalar_lea.vmem %s5, %s837
      $region56: #{_lambda_.5} parent=51 // pred_fallthru
        _
      // Predicated region
      $region57: #{_lambda_.5} parent=51 // pred_check
        %p839 = pneg %p178
      $region58: #{_lambda_.5} parent=51 // pred_check_branch
        %841 = sbr.rel (%p839) target = $region60
      $region59: #{_lambda_.5} parent=51 // pred_region
        %p842 = scmp.lt.s32.totalorder %s19, 1
        %s843 = scalar_select %p842, %s19, 1
        %s844 = smul.addr %s843, 2
        %s845 = scalar_lea.vmem %s6, %s844
      $region60: #{_lambda_.5} parent=51 // pred_fallthru
        _
    $region52: #{_lambda_.5} parent=5 // pred_fallthru
      _
  $region6: #{_lambda_.5} parent=0 // loop_footer
    %s17 = sadd.s32 1, %s13
  $region7: #{_lambda_.5} parent=0 // loop_footer_branch
    %12 = sbr.rel target = $region3
  $region8: #{_lambda_.5} parent=0 // loop_exit
    _

</llo_original>
